<compile_context>
chip_gen: v6e
topology: v6e:2x2x1
jax: 0.10.0
libtpu: 0.0.40
codegen_flags: <defaults>
</compile_context>

<pallas_src>
import functools

import jax
import jax.numpy as jnp
from jax.experimental import pallas as pl
from jax.experimental.pallas import tpu as pltpu

BN_EPS = 1e-5
# One-hot MXU gather (VMEM-resident table) is used while the row-padded table
# has at most this many rows; beyond that the gather stays in XLA.
ONE_HOT_MAX_ROWS = 4096
MAX_TILE_B = 4096  # per-step rows; keeps double-buffered tiles well inside VMEM


def _round_up(x, m):
    return (x + m - 1) // m * m


def _pick_tiling(batch):
    """Pick tile_b first, then pad the batch up to a multiple of it."""
    b128 = _round_up(max(batch, 1), 128)
    if b128 <= 128:
        tile_b = 128  # too small to split across two TensorCores
    else:
        # >= 2 grid steps so dimension_semantics=("parallel",) can shard the
        # batch across both v7x TensorCores; cap the per-step tile at 4096 rows.
        tile_b = min(MAX_TILE_B, _round_up((b128 + 1) // 2, 128))
    b_pad = _round_up(b128, tile_b)
    return tile_b, b_pad, b_pad // tile_b


def _ncf_fused_kernel(idx_ref, tab_ref, w1_ref, b1_ref, w2_ref, b2_ref,
                      wg_ref, wm_ref, fcb_ref, out_ref, *,
                      num_fields, embed_dim, user_field_idx, item_field_idx):
    """One batch tile: in-kernel one-hot gather + MLP (BN pre-folded) + GMF + head."""
    tb = idx_ref.shape[0]
    n_rows = tab_ref.shape[0]
    table = tab_ref[...]                                           # (Np, D) bf16, VMEM-resident
    row_ids = jax.lax.broadcasted_iota(jnp.int32, (tb, n_rows), 1)

    # Gather each field via a one-hot MXU matmul and feed MLP layer 1
    # field-by-field (identical to the Linear over the concatenated embedding).
    h = jnp.zeros((tb, w1_ref.shape[1]), jnp.float32)
    emb_user = emb_item = None
    for f in range(num_fields):                                    # static Python loop
        onehot = (idx_ref[:, f:f + 1] == row_ids).astype(table.dtype)   # (tb, Np) bf16
        emb_f = jnp.dot(onehot, table, preferred_element_type=jnp.float32)  # (tb, D) f32
        h = h + jnp.dot(emb_f.astype(jnp.bfloat16),
                        w1_ref[f * embed_dim:(f + 1) * embed_dim, :],
                        preferred_element_type=jnp.float32)
        if f == user_field_idx:
            emb_user = emb_f
        if f == item_field_idx:
            emb_item = emb_f

    # MLP (BatchNorm folded into w/b at wrapper time; Dropout = identity in eval).
    h = jnp.maximum(h + b1_ref[...], 0.0)
    h = jnp.dot(h.astype(jnp.bfloat16), w2_ref[...],
                preferred_element_type=jnp.float32) + b2_ref[...]
    h = jnp.maximum(h, 0.0)                                        # (tb, H2P) f32

    # GMF branch + fc head (VPU multiplies + lane reductions; no N=1 matmuls).
    gmf = emb_user * emb_item
    logit = (jnp.sum(gmf * wg_ref[...], axis=-1, keepdims=True)
             + jnp.sum(h * wm_ref[...], axis=-1, keepdims=True)
             + fcb_ref[...])                                       # (tb, 1)

    # Lane-dense store: repack (tb, 1) -> (1, tb//128, 128) in-kernel.
    out_ref[...] = jax.nn.sigmoid(logit).reshape(out_ref.shape)


def _ncf_stream_kernel(x_ref, w1_ref, b1_ref, w2_ref, b2_ref,
                       wg_ref, wm_ref, fcb_ref, out_ref, *,
                       embed_dim, user_field_idx, item_field_idx):
    """Large-vocab fallback: gathered embeddings streamed once; GMF via lane slices."""
    x = x_ref[...]                                                 # (tb, F*D) bf16
    uo = user_field_idx * embed_dim
    io = item_field_idx * embed_dim
    gmf = (x[:, uo:uo + embed_dim].astype(jnp.float32)
           * x[:, io:io + embed_dim].astype(jnp.float32))
    h = jnp.dot(x, w1_ref[...], preferred_element_type=jnp.float32) + b1_ref[...]
    h = jnp.maximum(h, 0.0)
    h = jnp.dot(h.astype(jnp.bfloat16), w2_ref[...],
                preferred_element_type=jnp.float32) + b2_ref[...]
    h = jnp.maximum(h, 0.0)
    logit = (jnp.sum(gmf * wg_ref[...], axis=-1, keepdims=True)
             + jnp.sum(h * wm_ref[...], axis=-1, keepdims=True)
             + fcb_ref[...])
    out_ref[...] = jax.nn.sigmoid(logit).reshape(out_ref.shape)


def init_params(key, field_dims, embed_dim, mlp_dims):
    n_emb = sum(field_dims)
    in_dim = len(field_dims) * embed_dim
    ks = jax.random.split(key, 5)

    # Embedding: xavier_uniform over (n_emb, embed_dim); stored bf16 in HBM.
    bound = (6.0 / (n_emb + embed_dim)) ** 0.5
    emb_table = jax.random.uniform(ks[0], (n_emb, embed_dim), jnp.float32,
                                   -bound, bound).astype(jnp.bfloat16)

    offs = [0]
    for d in field_dims[:-1]:
        offs.append(offs[-1] + d)
    offsets = jnp.asarray(offs, dtype=jnp.int32)

    def lin(k, fan_in, fan_out):
        # torch.nn.init.normal_(weight, 0.0, 0.01); zero bias. Stored (in, out).
        w = 0.01 * jax.random.normal(k, (fan_in, fan_out), jnp.float32)
        b = jnp.zeros((1, fan_out), jnp.float32)
        return w, b

    w1, b1 = lin(ks[1], in_dim, mlp_dims[0])
    w2, b2 = lin(ks[2], mlp_dims[0], mlp_dims[1])
    # Final fc weight split into the gmf columns and mlp columns
    # (matches torch.cat([gmf, mlp_out], dim=1) column ordering).
    fcw_gmf = 0.01 * jax.random.normal(ks[3], (1, embed_dim), jnp.float32)
    fcw_mlp = 0.01 * jax.random.normal(ks[4], (1, mlp_dims[1]), jnp.float32)
    fcb = jnp.zeros((1, 1), jnp.float32)

    def bn(dim):  # default BatchNorm1d (gamma=1, beta=0, mean=0, var=1)
        return (jnp.ones((1, dim), jnp.float32), jnp.zeros((1, dim), jnp.float32),
                jnp.zeros((1, dim), jnp.float32), jnp.ones((1, dim), jnp.float32))

    g1, be1, m1, v1 = bn(mlp_dims[0])
    g2, be2, m2, v2 = bn(mlp_dims[1])

    return dict(emb_table=emb_table, offsets=offsets,
                w1=w1, b1=b1, g1=g1, be1=be1, m1=m1, v1=v1,
                w2=w2, b2=b2, g2=g2, be2=be2, m2=m2, v2=v2,
                fcw_gmf=fcw_gmf, fcw_mlp=fcw_mlp, fcb=fcb)


def ncf_forward(index, params, *, user_field_idx, item_field_idx, embed_dim):
    """index: int32 (batch, num_fields). Returns (sigmoid scores (batch,), index)."""
    B, F = index.shape
    D = embed_dim
    in_dim = F * D
    H1 = params["w1"].shape[1]
    H2 = params["w2"].shape[1]
    H1P = _round_up(H1, 128)
    H2P = _round_up(H2, 128)

    tile_b, b_pad, n_tiles = _pick_tiling(B)

    # Fold BatchNorm1d (eval) into the Linears; pad hidden dims to 128 lanes.
    s1 = params["g1"] * jax.lax.rsqrt(params["v1"] + BN_EPS)
    w1f = jnp.pad(params["w1"] * s1, ((0, 0), (0, H1P - H1))).astype(jnp.bfloat16)
    b1f = jnp.pad((params["b1"] - params["m1"]) * s1 + params["be1"],
                  ((0, 0), (0, H1P - H1)))
    s2 = params["g2"] * jax.lax.rsqrt(params["v2"] + BN_EPS)
    w2f = jnp.pad(params["w2"] * s2,
                  ((0, H1P - H1), (0, H2P - H2))).astype(jnp.bfloat16)
    b2f = jnp.pad((params["b2"] - params["m2"]) * s2 + params["be2"],
                  ((0, 0), (0, H2P - H2)))
    wg = params["fcw_gmf"]
    wm = jnp.pad(params["fcw_mlp"], ((0, 0), (0, H2P - H2)))
    fcb = params["fcb"]

    # Offset-shifted indices; padded batch rows reuse index 0 (valid since all
    # field_dims >= 1); their garbage logits are dropped by the final [:B].
    idx = (jnp.pad(index, ((0, b_pad - B), (0, 0))).astype(jnp.int32)
           + params["offsets"][None, :])

    row2 = lambda i: (i, 0)      # batch-tiled operands
    const2 = lambda i: (0, 0)    # VMEM-resident weights (no re-DMA across steps)
    weight_specs = [
        pl.BlockSpec((in_dim, H1P), const2),   # w1 (BN-folded, bf16)
        pl.BlockSpec((1, H1P), const2),        # b1 (BN-folded)
        pl.BlockSpec((H1P, H2P), const2),      # w2 (BN-folded, bf16)
        pl.BlockSpec((1, H2P), const2),        # b2 (BN-folded)
        pl.BlockSpec((1, D), const2),          # fc weight row (gmf part)
        pl.BlockSpec((1, H2P), const2),        # fc weight row (mlp part)
        pl.BlockSpec((1, 1), const2),          # fc bias
    ]
    # Lane-dense output slab, reshaped to (B,) in the wrapper.
    out_shape = jax.ShapeDtypeStruct((n_tiles, tile_b // 128, 128), jnp.float32)
    out_spec = pl.BlockSpec((1, tile_b // 128, 128), lambda i: (i, 0, 0))
    compiler_params = pltpu.CompilerParams(
        dimension_semantics=("parallel",),
        vmem_limit_bytes=32 * 1024 * 1024)

    weight_bytes = ((w1f.size + w2f.size) * 2
                    + (b1f.size + b2f.size + wg.size + wm.size + fcb.size) * 4)

    n_emb = params["emb_table"].shape[0]
    n_pad = _round_up(n_emb, 128)
    if n_pad <= ONE_HOT_MAX_ROWS:
        # Fused gather: bf16 table VMEM-resident; HBM per row = F*4 B of indices.
        table = jnp.pad(params["emb_table"], ((0, n_pad - n_emb), (0, 0)))
        cost = pl.CostEstimate(
            flops=2 * b_pad * (F * n_pad * D + in_dim * H1P + H1P * H2P),
            transcendentals=b_pad,
            bytes_accessed=b_pad * (F * 4 + 4) + table.size * 2 + weight_bytes)
        kernel = functools.partial(
            _ncf_fused_kernel, num_fields=F, embed_dim=D,
            user_field_idx=user_field_idx, item_field_idx=item_field_idx)
        out = pl.pallas_call(
            kernel,
            out_shape=out_shape,
            grid=(n_tiles,),
            in_specs=[pl.BlockSpec((tile_b, F), row2),    # offset indices
                      pl.BlockSpec((n_pad, D), const2)]   # embedding table (VMEM-resident)
                     + weight_specs,
            out_specs=out_spec,
            compiler_params=compiler_params,
            cost_estimate=cost,
        )(idx, table, w1f, b1f, w2f, b2f, wg, wm, fcb)
    else:
        # Large-vocab fallback: gather in XLA, stream the gathered rows once
        # (GMF slices come out of the same tile in-kernel, not a second stream).
        # TODO(synk): a manual pl.ANY + make_async_copy DMA gather would remove
        # the HBM round-trip, but is DMA-descriptor-bound at D=32.
        emb_flat = jnp.take(params["emb_table"], idx, axis=0).reshape(b_pad, in_dim)
        cost = pl.CostEstimate(
            flops=2 * b_pad * (in_dim * H1P + H1P * H2P),
            transcendentals=b_pad,
            bytes_accessed=b_pad * (in_dim * 2 + 4) + weight_bytes)
        kernel = functools.partial(
            _ncf_stream_kernel, embed_dim=D,
            user_field_idx=user_field_idx, item_field_idx=item_field_idx)
        out = pl.pallas_call(
            kernel,
            out_shape=out_shape,
            grid=(n_tiles,),
            in_specs=[pl.BlockSpec((tile_b, in_dim), row2)] + weight_specs,
            out_specs=out_spec,
            compiler_params=compiler_params,
            cost_estimate=cost,
        )(emb_flat, w1f, b1f, w2f, b2f, wg, wm, fcb)

    return out.reshape(b_pad)[:B], index


def ncf_reference(index, params, *, user_field_idx, item_field_idx, embed_dim):
    """Pure-JAX f32 reference of the PyTorch forward (eval mode)."""
    emb = jnp.take(params["emb_table"].astype(jnp.float32),
                   index + params["offsets"][None, :], axis=0)     # (B, F, D)
    B, F, D = emb.shape
    gmf = emb[:, user_field_idx, :] * emb[:, item_field_idx, :]
    x = emb.reshape(B, F * D)

    def bn(y, g, be, m, v):
        return (y - m) * g * jax.lax.rsqrt(v + BN_EPS) + be

    h = x @ params["w1"] + params["b1"]
    h = jnp.maximum(bn(h, params["g1"], params["be1"], params["m1"], params["v1"]), 0.0)
    h = h @ params["w2"] + params["b2"]
    h = jnp.maximum(bn(h, params["g2"], params["be2"], params["m2"], params["v2"]), 0.0)
    logit = (jnp.sum(gmf * params["fcw_gmf"], axis=-1)
             + jnp.sum(h * params["fcw_mlp"], axis=-1)
             + params["fcb"][0, 0])
    return jax.nn.sigmoid(logit)


if __name__ == "__main__":
    field_dims = (12, 16)          # (num_users, num_items)
    user_field_idx, item_field_idx = 0, 1
    embed_dim = 32
    mlp_dims = (64, 32)
    batch = 8

    key = jax.random.PRNGKey(0)
    k_param, k_u, k_i = jax.random.split(key, 3)
    params = init_params(k_param, field_dims, embed_dim, mlp_dims)

    users = jax.random.randint(k_u, (batch, 1), 0, field_dims[0], dtype=jnp.int32)
    items = jax.random.randint(k_i, (batch, 1), 0, field_dims[1], dtype=jnp.int32)
    x = jnp.concatenate([users, items], axis=1)               # (batch, num_fields)

    probs, idx_out = ncf_forward(x, params,
                                 user_field_idx=user_field_idx,
                                 item_field_idx=item_field_idx,
                                 embed_dim=embed_dim)
    jax.block_until_ready(probs)

    ref = ncf_reference(x, params,
                        user_field_idx=user_field_idx,
                        item_field_idx=item_field_idx,
                        embed_dim=embed_dim)

    assert probs.shape == (batch,)
    assert idx_out.shape == x.shape
    assert bool(jnp.all((probs >= 0.0) & (probs <= 1.0)))
    assert bool(jnp.max(jnp.abs(probs - ref)) < 1e-2), (probs, ref)
    print("KERNEL_OK")
</pallas_src>

<mosaic_0001>
module attributes {stable_mosaic.version = 11 : i64} {
  func.func @_ncf_fused_kernel(%arg0: i32, %arg1: memref<128x2xi32, #tpu.memory_space<vmem>>, %arg2: memref<128x32xbf16, #tpu.memory_space<vmem>>, %arg3: memref<64x128xbf16, #tpu.memory_space<vmem>>, %arg4: memref<1x128xf32, #tpu.memory_space<vmem>>, %arg5: memref<128x128xbf16, #tpu.memory_space<vmem>>, %arg6: memref<1x128xf32, #tpu.memory_space<vmem>>, %arg7: memref<1x32xf32, #tpu.memory_space<vmem>>, %arg8: memref<1x128xf32, #tpu.memory_space<vmem>>, %arg9: memref<1x1xf32, #tpu.memory_space<vmem>>, %arg10: memref<1x1x128xf32, #tpu.memory_space<vmem>>) attributes {dimension_semantics = [#tpu.dimension_semantics<parallel>], iteration_bounds = array<i64: 1>, scalar_prefetch = 0 : i64, scratch_operands = 0 : i64, tpu.core_type = #tpu.core_type<tc>, window_params = [{transform_indices = @transform_0, window_bounds = array<i64: 128, 2>}, {pipeline_mode = #tpu.pipeline_mode<synchronous>, transform_indices = @transform_1, window_bounds = array<i64: 128, 32>}, {pipeline_mode = #tpu.pipeline_mode<synchronous>, transform_indices = @transform_2, window_bounds = array<i64: 64, 128>}, {pipeline_mode = #tpu.pipeline_mode<synchronous>, transform_indices = @transform_3, window_bounds = array<i64: 1, 128>}, {pipeline_mode = #tpu.pipeline_mode<synchronous>, transform_indices = @transform_4, window_bounds = array<i64: 128, 128>}, {pipeline_mode = #tpu.pipeline_mode<synchronous>, transform_indices = @transform_5, window_bounds = array<i64: 1, 128>}, {pipeline_mode = #tpu.pipeline_mode<synchronous>, transform_indices = @transform_6, window_bounds = array<i64: 1, 32>}, {pipeline_mode = #tpu.pipeline_mode<synchronous>, transform_indices = @transform_7, window_bounds = array<i64: 1, 128>}, {pipeline_mode = #tpu.pipeline_mode<synchronous>, transform_indices = @transform_8, window_bounds = array<i64: 1, 1>}, {transform_indices = @transform_9, window_bounds = array<i64: 1, 1, 128>}]} {
    %c0 = arith.constant 0 : index
    %c0_0 = arith.constant 0 : index
    %0 = vector.load %arg2[%c0, %c0_0] : memref<128x32xbf16, #tpu.memory_space<vmem>>, vector<128x32xbf16>
    %1 = tpu.iota {dimensions = array<i32: 1>} : vector<128x128xi32>
    %cst = arith.constant 0.000000e+00 : f32
    %2 = vector.broadcast %cst : f32 to vector<128x128xf32>
    %c0_1 = arith.constant 0 : index
    %c0_2 = arith.constant 0 : index
    %3 = vector.load %arg1[%c0_1, %c0_2] : memref<128x2xi32, #tpu.memory_space<vmem>>, vector<128x1xi32>
    %4 = vector.broadcast %3 : vector<128x1xi32> to vector<128x128xi32>
    %5 = arith.cmpi eq, %4, %1 : vector<128x128xi32>
    %6 = arith.extui %5 : vector<128x128xi1> to vector<128x128xi32>
    %7 = arith.sitofp %6 : vector<128x128xi32> to vector<128x128xf32>
    %8 = arith.truncf %7 : vector<128x128xf32> to vector<128x128xbf16>
    %cst_3 = arith.constant dense<0.000000e+00> : vector<128x32xf32>
    %9 = tpu.matmul %8, %0, %cst_3 {dimension_numbers = #tpu.dot_dimension_numbers<[1], [0], [0], [1], [0, 0, 1, 1], [], []>} : vector<128x128xbf16>, vector<128x32xbf16>, vector<128x32xf32> -> vector<128x32xf32>
    %10 = arith.truncf %9 : vector<128x32xf32> to vector<128x32xbf16>
    %c0_4 = arith.constant 0 : index
    %c0_5 = arith.constant 0 : index
    %11 = vector.load %arg3[%c0_4, %c0_5] : memref<64x128xbf16, #tpu.memory_space<vmem>>, vector<32x128xbf16>
    %cst_6 = arith.constant dense<0.000000e+00> : vector<128x128xf32>
    %12 = tpu.matmul %10, %11, %cst_6 {dimension_numbers = #tpu.dot_dimension_numbers<[1], [0], [0], [1], [0, 0, 1, 1], [], []>} : vector<128x32xbf16>, vector<32x128xbf16>, vector<128x128xf32> -> vector<128x128xf32>
    %13 = arith.addf %2, %12 : vector<128x128xf32>
    %c0_7 = arith.constant 0 : index
    %c1 = arith.constant 1 : index
    %14 = vector.load %arg1[%c0_7, %c1] : memref<128x2xi32, #tpu.memory_space<vmem>>, vector<128x1xi32>
    %15 = vector.broadcast %14 : vector<128x1xi32> to vector<128x128xi32>
    %16 = arith.cmpi eq, %15, %1 : vector<128x128xi32>
    %17 = arith.extui %16 : vector<128x128xi1> to vector<128x128xi32>
    %18 = arith.sitofp %17 : vector<128x128xi32> to vector<128x128xf32>
    %19 = arith.truncf %18 : vector<128x128xf32> to vector<128x128xbf16>
    %cst_8 = arith.constant dense<0.000000e+00> : vector<128x32xf32>
    %20 = tpu.matmul %19, %0, %cst_8 {dimension_numbers = #tpu.dot_dimension_numbers<[1], [0], [0], [1], [0, 0, 1, 1], [], []>} : vector<128x128xbf16>, vector<128x32xbf16>, vector<128x32xf32> -> vector<128x32xf32>
    %21 = arith.truncf %20 : vector<128x32xf32> to vector<128x32xbf16>
    %c32 = arith.constant 32 : index
    %c0_9 = arith.constant 0 : index
    %22 = vector.load %arg3[%c32, %c0_9] : memref<64x128xbf16, #tpu.memory_space<vmem>>, vector<32x128xbf16>
    %cst_10 = arith.constant dense<0.000000e+00> : vector<128x128xf32>
    %23 = tpu.matmul %21, %22, %cst_10 {dimension_numbers = #tpu.dot_dimension_numbers<[1], [0], [0], [1], [0, 0, 1, 1], [], []>} : vector<128x32xbf16>, vector<32x128xbf16>, vector<128x128xf32> -> vector<128x128xf32>
    %24 = arith.addf %13, %23 : vector<128x128xf32>
    %c0_11 = arith.constant 0 : index
    %c0_12 = arith.constant 0 : index
    %25 = vector.load %arg4[%c0_11, %c0_12] : memref<1x128xf32, #tpu.memory_space<vmem>>, vector<1x128xf32>
    %26 = vector.broadcast %25 : vector<1x128xf32> to vector<128x128xf32>
    %27 = arith.addf %24, %26 : vector<128x128xf32>
    %cst_13 = arith.constant 0.000000e+00 : f32
    %28 = vector.broadcast %cst_13 : f32 to vector<128x128xf32>
    %29 = arith.maximumf %27, %28 : vector<128x128xf32>
    %30 = arith.truncf %29 : vector<128x128xf32> to vector<128x128xbf16>
    %c0_14 = arith.constant 0 : index
    %c0_15 = arith.constant 0 : index
    %31 = vector.load %arg5[%c0_14, %c0_15] : memref<128x128xbf16, #tpu.memory_space<vmem>>, vector<128x128xbf16>
    %cst_16 = arith.constant dense<0.000000e+00> : vector<128x128xf32>
    %32 = tpu.matmul %30, %31, %cst_16 {dimension_numbers = #tpu.dot_dimension_numbers<[1], [0], [0], [1], [0, 0, 1, 1], [], []>} : vector<128x128xbf16>, vector<128x128xbf16>, vector<128x128xf32> -> vector<128x128xf32>
    %c0_17 = arith.constant 0 : index
    %c0_18 = arith.constant 0 : index
    %33 = vector.load %arg6[%c0_17, %c0_18] : memref<1x128xf32, #tpu.memory_space<vmem>>, vector<1x128xf32>
    %34 = vector.broadcast %33 : vector<1x128xf32> to vector<128x128xf32>
    %35 = arith.addf %32, %34 : vector<128x128xf32>
    %cst_19 = arith.constant 0.000000e+00 : f32
    %36 = vector.broadcast %cst_19 : f32 to vector<128x128xf32>
    %37 = arith.maximumf %35, %36 : vector<128x128xf32>
    %38 = arith.mulf %9, %20 : vector<128x32xf32>
    %c0_20 = arith.constant 0 : index
    %c0_21 = arith.constant 0 : index
    %39 = vector.load %arg7[%c0_20, %c0_21] : memref<1x32xf32, #tpu.memory_space<vmem>>, vector<1x32xf32>
    %40 = vector.broadcast %39 : vector<1x32xf32> to vector<128x32xf32>
    %41 = arith.mulf %38, %40 : vector<128x32xf32>
    %cst_22 = arith.constant dense<0.000000e+00> : vector<128xf32>
    %42 = vector.multi_reduction <add>, %41, %cst_22 [1] : vector<128x32xf32> to vector<128xf32>
    %43 = vector.shape_cast %42 : vector<128xf32> to vector<128x1xf32>
    %c0_23 = arith.constant 0 : index
    %c0_24 = arith.constant 0 : index
    %44 = vector.load %arg8[%c0_23, %c0_24] : memref<1x128xf32, #tpu.memory_space<vmem>>, vector<1x128xf32>
    %45 = vector.broadcast %44 : vector<1x128xf32> to vector<128x128xf32>
    %46 = arith.mulf %37, %45 : vector<128x128xf32>
    %cst_25 = arith.constant dense<0.000000e+00> : vector<128xf32>
    %47 = vector.multi_reduction <add>, %46, %cst_25 [1] : vector<128x128xf32> to vector<128xf32>
    %48 = vector.shape_cast %47 : vector<128xf32> to vector<128x1xf32>
    %49 = arith.addf %43, %48 : vector<128x1xf32>
    %c0_26 = arith.constant 0 : index
    %c0_27 = arith.constant 0 : index
    %50 = vector.load %arg9[%c0_26, %c0_27] : memref<1x1xf32, #tpu.memory_space<vmem>>, vector<1x1xf32>
    %51 = vector.broadcast %50 : vector<1x1xf32> to vector<128x1xf32>
    %52 = arith.addf %49, %51 : vector<128x1xf32>
    %53 = arith.negf %52 : vector<128x1xf32>
    %54 = math.exp %53 : vector<128x1xf32>
    %cst_28 = arith.constant 1.000000e+00 : f32
    %55 = vector.broadcast %cst_28 : f32 to vector<128x1xf32>
    %56 = arith.addf %55, %54 : vector<128x1xf32>
    %57 = arith.divf %55, %56 : vector<128x1xf32>
    %58 = vector.shape_cast %57 : vector<128x1xf32> to vector<1x1x128xf32>
    %c0_29 = arith.constant 0 : index
    %c0_30 = arith.constant 0 : index
    %c0_31 = arith.constant 0 : index
    %59 = vector.load %arg10[%c0_29, %c0_30, %c0_31] : memref<1x1x128xf32, #tpu.memory_space<vmem>>, vector<1x1x128xf32>
    tpu.vector_store %arg10[%c0_29, %c0_30, %c0_31], %58 {strides = array<i32>} : memref<1x1x128xf32, #tpu.memory_space<vmem>>, vector<1x1x128xf32>,
    return
  }
  func.func @transform_0(%arg0: i32) -> (i32, i32) {
    %c0_i32 = arith.constant 0 : i32
    %c0_i32_0 = arith.constant 0 : i32
    return %arg0, %c0_i32 : i32, i32
  }
  func.func @transform_1(%arg0: i32) -> (i32, i32) {
    %c0_i32 = arith.constant 0 : i32
    %c0_i32_0 = arith.constant 0 : i32
    %c0_i32_1 = arith.constant 0 : i32
    return %c0_i32, %c0_i32_0 : i32, i32
  }
  func.func @transform_2(%arg0: i32) -> (i32, i32) {
    %c0_i32 = arith.constant 0 : i32
    %c0_i32_0 = arith.constant 0 : i32
    %c0_i32_1 = arith.constant 0 : i32
    return %c0_i32, %c0_i32_0 : i32, i32
  }
  func.func @transform_3(%arg0: i32) -> (i32, i32) {
    %c0_i32 = arith.constant 0 : i32
    %c0_i32_0 = arith.constant 0 : i32
    %c0_i32_1 = arith.constant 0 : i32
    return %c0_i32, %c0_i32_0 : i32, i32
  }
  func.func @transform_4(%arg0: i32) -> (i32, i32) {
    %c0_i32 = arith.constant 0 : i32
    %c0_i32_0 = arith.constant 0 : i32
    %c0_i32_1 = arith.constant 0 : i32
    return %c0_i32, %c0_i32_0 : i32, i32
  }
  func.func @transform_5(%arg0: i32) -> (i32, i32) {
    %c0_i32 = arith.constant 0 : i32
    %c0_i32_0 = arith.constant 0 : i32
    %c0_i32_1 = arith.constant 0 : i32
    return %c0_i32, %c0_i32_0 : i32, i32
  }
  func.func @transform_6(%arg0: i32) -> (i32, i32) {
    %c0_i32 = arith.constant 0 : i32
    %c0_i32_0 = arith.constant 0 : i32
    %c0_i32_1 = arith.constant 0 : i32
    return %c0_i32, %c0_i32_0 : i32, i32
  }
  func.func @transform_7(%arg0: i32) -> (i32, i32) {
    %c0_i32 = arith.constant 0 : i32
    %c0_i32_0 = arith.constant 0 : i32
    %c0_i32_1 = arith.constant 0 : i32
    return %c0_i32, %c0_i32_0 : i32, i32
  }
  func.func @transform_8(%arg0: i32) -> (i32, i32) {
    %c0_i32 = arith.constant 0 : i32
    %c0_i32_0 = arith.constant 0 : i32
    %c0_i32_1 = arith.constant 0 : i32
    return %c0_i32, %c0_i32_0 : i32, i32
  }
  func.func @transform_9(%arg0: i32) -> (i32, i32, i32) {
    %c0_i32 = arith.constant 0 : i32
    %c0_i32_0 = arith.constant 0 : i32
    %c0_i32_1 = arith.constant 0 : i32
    return %arg0, %c0_i32, %c0_i32_0 : i32, i32, i32
  }
}

</mosaic_0001>

<llo_original>
// kernel: tpu_custom_call.1
$region0: #{tpu_custom_call.1}
  #allocation0 [shape = 'u32[]', space=smem, size = 0x4, offset = 0x4, fixed_abs, tag = 'smem constant byte address 0x4 - core index']
  #allocation1 [shape = 'u32[144,128]{1,0:T(1,128)}', space=vmem, size = 0x12000, scoped, tag = 'internal scratch']
  #allocation2 [shape = 'f32[1,1]{1,0:T(1,128)S(1)}', space=vmem, size = 0x200, scoped, tag = 'scoped memory for tpu_custom_call.1']
  %s0 = inlined_call_operand.vmem [shape: s32[128,2], index: 0, kind: input, shape index: {}]
  %s1 = inlined_call_operand.vmem [shape: bf16[128,32], index: 1, kind: input, shape index: {}]
  %s2 = inlined_call_operand.vmem [shape: bf16[64,128], index: 2, kind: input, shape index: {}]
  %s3 = inlined_call_operand.vmem [shape: f32[1,128], index: 3, kind: input, shape index: {}]
  %s4 = inlined_call_operand.vmem [shape: bf16[128,128], index: 4, kind: input, shape index: {}]
  %s5 = inlined_call_operand.vmem [shape: f32[1,128], index: 5, kind: input, shape index: {}]
  %s6 = inlined_call_operand.vmem [shape: f32[1,32], index: 6, kind: input, shape index: {}]
  %s7 = inlined_call_operand.vmem [shape: f32[1,128], index: 7, kind: input, shape index: {}]
  %s8 = inlined_call_operand.<no memory space> [shape: f32[1,1], index: 8, kind: input, shape index: {}]
  %s9 = inlined_call_operand.hbm [shape: f32[1,1,128], index: 9, kind: output, shape index: {}]
  %s10 = sld [smem:[#allocation0]]
  $region46: #{tpu_custom_call.1} parent=0
    _
  %s12 = ssub.s32 1, %s10
  %s13 = scalar_select 0, %s12, %s10
  %v14 = vstv %s8
  %15 = vst [vmem:[#allocation2] sm:$0x1] %v14
  $region1: #{tpu_custom_call.1} parent=0
    #allocation3 [shape = 'u8[512]{0}', space=vmem, size = 0x400, scoped, tag = 'output window, operand 0, single buffered']
    #allocation4 [shape = 's32[1]{0}', space=sflag, size = 0x4, scoped, tag = 'scoped memory for tpu_custom_call.1']
    %16 = vsyncpa [#allocation4], 0
    // Predicated region
    $region2: #{tpu_custom_call.1} parent=1 // pred_check
      _
    $region3: #{tpu_custom_call.1} parent=1 // pred_check_branch
      %18 = sbr.rel (0) target = $region5
    $region4: #{tpu_custom_call.1} parent=1 // pred_region
      _
    $region5: #{tpu_custom_call.1} parent=1 // pred_fallthru
      _
    // Predicated region
    $region6: #{tpu_custom_call.1} parent=1 // pred_check
      _
    $region7: #{tpu_custom_call.1} parent=1 // pred_check_branch
      %20 = sbr.rel (0) target = $region9
    $region8: #{tpu_custom_call.1} parent=1 // pred_region
      _
    $region9: #{tpu_custom_call.1} parent=1 // pred_fallthru
      _
    // Predicated region
    $region10: #{tpu_custom_call.1} parent=1 // pred_check
      _
    $region11: #{tpu_custom_call.1} parent=1 // pred_check_branch
      %22 = sbr.rel (0) target = $region13
    $region12: #{tpu_custom_call.1} parent=1 // pred_region
      _
    $region13: #{tpu_custom_call.1} parent=1 // pred_fallthru
      _
    // Predicated region
    $region14: #{tpu_custom_call.1} parent=1 // pred_check
      _
    $region15: #{tpu_custom_call.1} parent=1 // pred_check_branch
      %24 = sbr.rel (0) target = $region17
    $region16: #{tpu_custom_call.1} parent=1 // pred_region
      _
    $region17: #{tpu_custom_call.1} parent=1 // pred_fallthru
      _
    // Predicated region
    $region18: #{tpu_custom_call.1} parent=1 // pred_check
      _
    $region19: #{tpu_custom_call.1} parent=1 // pred_check_branch
      %26 = sbr.rel (0) target = $region21
    $region20: #{tpu_custom_call.1} parent=1 // pred_region
      _
    $region21: #{tpu_custom_call.1} parent=1 // pred_fallthru
      _
    // Predicated region
    $region22: #{tpu_custom_call.1} parent=1 // pred_check
      _
    $region23: #{tpu_custom_call.1} parent=1 // pred_check_branch
      %28 = sbr.rel (0) target = $region25
    $region24: #{tpu_custom_call.1} parent=1 // pred_region
      _
    $region25: #{tpu_custom_call.1} parent=1 // pred_fallthru
      _
    // Predicated region
    $region26: #{tpu_custom_call.1} parent=1 // pred_check
      _
    $region27: #{tpu_custom_call.1} parent=1 // pred_check_branch
      %30 = sbr.rel (0) target = $region29
    $region28: #{tpu_custom_call.1} parent=1 // pred_region
      _
    $region29: #{tpu_custom_call.1} parent=1 // pred_fallthru
      _
    // Predicated region
    $region30: #{tpu_custom_call.1} parent=1 // pred_check
      _
    $region31: #{tpu_custom_call.1} parent=1 // pred_check_branch
      %32 = sbr.rel (0) target = $region33
    $region32: #{tpu_custom_call.1} parent=1 // pred_region
      _
    $region33: #{tpu_custom_call.1} parent=1 // pred_fallthru
      _
    // Predicated region
    $region34: #{tpu_custom_call.1} parent=1 // pred_check
      _
    $region35: #{tpu_custom_call.1} parent=1 // pred_check_branch
      %34 = sbr.rel (0) target = $region37
    $region36: #{tpu_custom_call.1} parent=1 // pred_region
      _
    $region37: #{tpu_custom_call.1} parent=1 // pred_fallthru
      _
    %v36 = vld [vmem:[%s1] sm:$0xf]
    %v37 = vld [vmem:[%s1 + $0x4] sm:$0xf]
    %v38 = vld [vmem:[%s1 + $0x8] sm:$0xf]
    %v39 = vld [vmem:[%s1 + $0xc] sm:$0xf]
    %v40 = vld [vmem:[%s1 + $0x10] sm:$0xf]
    %v41 = vld [vmem:[%s1 + $0x14] sm:$0xf]
    %v42 = vld [vmem:[%s1 + $0x18] sm:$0xf]
    %v43 = vld [vmem:[%s1 + $0x1c] sm:$0xf]
    %v44 = vld [vmem:[%s1 + $0x20] sm:$0xf]
    %v45 = vld [vmem:[%s1 + $0x24] sm:$0xf]
    %v46 = vld [vmem:[%s1 + $0x28] sm:$0xf]
    %v47 = vld [vmem:[%s1 + $0x2c] sm:$0xf]
    %v48 = vld [vmem:[%s1 + $0x30] sm:$0xf]
    %v49 = vld [vmem:[%s1 + $0x34] sm:$0xf]
    %v50 = vld [vmem:[%s1 + $0x38] sm:$0xf]
    %v51 = vld [vmem:[%s1 + $0x3c] sm:$0xf]
    %v52 = vlaneseq
    %v53 = vand.u32 %v52, 127
    %v54 = vld [vmem:[%s0] sm:$0xff]
    %v55 = vld [vmem:[%s0 + $0x8] sm:$0xff]
    %v56 = vld [vmem:[%s0 + $0x10] sm:$0xff]
    %v57 = vld [vmem:[%s0 + $0x18] sm:$0xff]
    %v58 = vld [vmem:[%s0 + $0x20] sm:$0xff]
    %v59 = vld [vmem:[%s0 + $0x28] sm:$0xff]
    %v60 = vld [vmem:[%s0 + $0x30] sm:$0xff]
    %v61 = vld [vmem:[%s0 + $0x38] sm:$0xff]
    %v62 = vld [vmem:[%s0 + $0x40] sm:$0xff]
    %v63 = vld [vmem:[%s0 + $0x48] sm:$0xff]
    %v64 = vld [vmem:[%s0 + $0x50] sm:$0xff]
    %v65 = vld [vmem:[%s0 + $0x58] sm:$0xff]
    %v66 = vld [vmem:[%s0 + $0x60] sm:$0xff]
    %v67 = vld [vmem:[%s0 + $0x68] sm:$0xff]
    %v68 = vld [vmem:[%s0 + $0x70] sm:$0xff]
    %v69 = vld [vmem:[%s0 + $0x78] sm:$0xff]
    %70 = vset.pattern.permute.xlu0 0
    %71 = vperm.xlu0 %70, %v54
    %v72 = vpop.permute.xlu0 %71
    %73 = vset.pattern.permute.xlu0 0
    %74 = vperm.xlu0 %73, %v55
    %v75 = vpop.permute.xlu0 %74
    %76 = vset.pattern.permute.xlu0 0
    %77 = vperm.xlu0 %76, %v56
    %v78 = vpop.permute.xlu0 %77
    %79 = vset.pattern.permute.xlu0 0
    %80 = vperm.xlu0 %79, %v57
    %v81 = vpop.permute.xlu0 %80
    %82 = vset.pattern.permute.xlu0 0
    %83 = vperm.xlu0 %82, %v58
    %v84 = vpop.permute.xlu0 %83
    %85 = vset.pattern.permute.xlu0 0
    %86 = vperm.xlu0 %85, %v59
    %v87 = vpop.permute.xlu0 %86
    %88 = vset.pattern.permute.xlu0 0
    %89 = vperm.xlu0 %88, %v60
    %v90 = vpop.permute.xlu0 %89
    %91 = vset.pattern.permute.xlu0 0
    %92 = vperm.xlu0 %91, %v61
    %v93 = vpop.permute.xlu0 %92
    %94 = vset.pattern.permute.xlu0 0
    %95 = vperm.xlu0 %94, %v62
    %v96 = vpop.permute.xlu0 %95
    %97 = vset.pattern.permute.xlu0 0
    %98 = vperm.xlu0 %97, %v63
    %v99 = vpop.permute.xlu0 %98
    %100 = vset.pattern.permute.xlu0 0
    %101 = vperm.xlu0 %100, %v64
    %v102 = vpop.permute.xlu0 %101
    %103 = vset.pattern.permute.xlu0 0
    %104 = vperm.xlu0 %103, %v65
    %v105 = vpop.permute.xlu0 %104
    %106 = vset.pattern.permute.xlu0 0
    %107 = vperm.xlu0 %106, %v66
    %v108 = vpop.permute.xlu0 %107
    %109 = vset.pattern.permute.xlu0 0
    %110 = vperm.xlu0 %109, %v67
    %v111 = vpop.permute.xlu0 %110
    %112 = vset.pattern.permute.xlu0 0
    %113 = vperm.xlu0 %112, %v68
    %v114 = vpop.permute.xlu0 %113
    %115 = vset.pattern.permute.xlu0 0
    %116 = vperm.xlu0 %115, %v69
    %v117 = vpop.permute.xlu0 %116
    %vm118 = vcmp.eq.s32.totalorder %v72, %v53
    %vm119 = vcmp.eq.s32.totalorder %v75, %v53
    %vm120 = vcmp.eq.s32.totalorder %v78, %v53
    %vm121 = vcmp.eq.s32.totalorder %v81, %v53
    %vm122 = vcmp.eq.s32.totalorder %v84, %v53
    %vm123 = vcmp.eq.s32.totalorder %v87, %v53
    %vm124 = vcmp.eq.s32.totalorder %v90, %v53
    %vm125 = vcmp.eq.s32.totalorder %v93, %v53
    %vm126 = vcmp.eq.s32.totalorder %v96, %v53
    %vm127 = vcmp.eq.s32.totalorder %v99, %v53
    %vm128 = vcmp.eq.s32.totalorder %v102, %v53
    %vm129 = vcmp.eq.s32.totalorder %v105, %v53
    %vm130 = vcmp.eq.s32.totalorder %v108, %v53
    %vm131 = vcmp.eq.s32.totalorder %v111, %v53
    %vm132 = vcmp.eq.s32.totalorder %v114, %v53
    %vm133 = vcmp.eq.s32.totalorder %v117, %v53
    %v134 = vsel %vm118, 1, 0
    %v135 = vsel %vm119, 1, 0
    %v136 = vsel %vm120, 1, 0
    %v137 = vsel %vm121, 1, 0
    %v138 = vsel %vm122, 1, 0
    %v139 = vsel %vm123, 1, 0
    %v140 = vsel %vm124, 1, 0
    %v141 = vsel %vm125, 1, 0
    %v142 = vsel %vm126, 1, 0
    %v143 = vsel %vm127, 1, 0
    %v144 = vsel %vm128, 1, 0
    %v145 = vsel %vm129, 1, 0
    %v146 = vsel %vm130, 1, 0
    %v147 = vsel %vm131, 1, 0
    %v148 = vsel %vm132, 1, 0
    %v149 = vsel %vm133, 1, 0
    %v150 = vcvt.s32.f32 %v134
    %v151 = vcvt.s32.f32 %v135
    %v152 = vcvt.s32.f32 %v136
    %v153 = vcvt.s32.f32 %v137
    %v154 = vcvt.s32.f32 %v138
    %v155 = vcvt.s32.f32 %v139
    %v156 = vcvt.s32.f32 %v140
    %v157 = vcvt.s32.f32 %v141
    %v158 = vcvt.s32.f32 %v142
    %v159 = vcvt.s32.f32 %v143
    %v160 = vcvt.s32.f32 %v144
    %v161 = vcvt.s32.f32 %v145
    %v162 = vcvt.s32.f32 %v146
    %v163 = vcvt.s32.f32 %v147
    %v164 = vcvt.s32.f32 %v148
    %v165 = vcvt.s32.f32 %v149
    %v166 = vpack.c.bf16 %v151, %v150
    %v167 = vpack.c.bf16 %v153, %v152
    %v168 = vpack.c.bf16 %v155, %v154
    %v169 = vpack.c.bf16 %v157, %v156
    %v170 = vpack.c.bf16 %v159, %v158
    %v171 = vpack.c.bf16 %v161, %v160
    %v172 = vpack.c.bf16 %v163, %v162
    %v173 = vpack.c.bf16 %v165, %v164
    %v190 = vunpack.c.l.b16 %v36
    %v191 = vunpack.c.l.b16 %v37
    %v192 = vunpack.c.l.b16 %v38
    %v193 = vunpack.c.l.b16 %v39
    %v194 = vunpack.c.l.b16 %v40
    %v195 = vunpack.c.l.b16 %v41
    %v196 = vunpack.c.l.b16 %v42
    %v197 = vunpack.c.l.b16 %v43
    %v198 = vunpack.c.l.b16 %v44
    %v199 = vunpack.c.l.b16 %v45
    %v200 = vunpack.c.l.b16 %v46
    %v201 = vunpack.c.l.b16 %v47
    %v202 = vunpack.c.l.b16 %v48
    %v203 = vunpack.c.l.b16 %v49
    %v204 = vunpack.c.l.b16 %v50
    %v205 = vunpack.c.l.b16 %v51
    %v206 = vpack.c.b16 %v191, %v190
    %v207 = vpack.c.b16 %v193, %v192
    %v208 = vpack.c.b16 %v195, %v194
    %v209 = vpack.c.b16 %v197, %v196
    %v210 = vpack.c.b16 %v199, %v198
    %v211 = vpack.c.b16 %v201, %v200
    %v212 = vpack.c.b16 %v203, %v202
    %v213 = vpack.c.b16 %v205, %v204
    %222 = vmatprep.subr.bf16.mxu0 0
    %223 = vmatpush1.bf16.msra.mxu0 %v213
    %224 = vmatprep.subr.bf16.mxu0 0
    %225 = vmatpush1.bf16.msra.mxu0 %v212
    %226 = vmatprep.subr.bf16.mxu0 0
    %227 = vmatpush1.bf16.msra.mxu0 %v211
    %228 = vmatprep.subr.bf16.mxu0 0
    %229 = vmatpush1.bf16.msra.mxu0 %v210
    %230 = vmatprep.subr.bf16.mxu0 0
    %231 = vmatpush1.bf16.msra.mxu0 %v209
    %232 = vmatprep.subr.bf16.mxu0 0
    %233 = vmatpush1.bf16.msra.mxu0 %v208
    %234 = vmatprep.subr.bf16.mxu0 0
    %235 = vmatpush1.bf16.msra.mxu0 %v207
    %236 = vmatprep.subr.bf16.mxu0 0
    %237 = vmatpush1.bf16.msra.mxu0 %v206
    %238 = vmatprep.subr.bf16.mxu0 0
    %239 = vmatpush2.bf16.msra.mxu0 0
    %240 = vmatprep.subr.bf16.mxu0 0
    %241 = vmatpush2.bf16.msra.mxu0 0
    %242 = vmatprep.subr.bf16.mxu0 0
    %243 = vmatpush2.bf16.msra.mxu0 0
    %244 = vmatprep.subr.bf16.mxu0 0
    %245 = vmatpush2.bf16.msra.mxu0 0
    %246 = vmatprep.subr.bf16.mxu0 0
    %247 = vmatpush2.bf16.msra.mxu0 0
    %248 = vmatprep.subr.bf16.mxu0 0
    %249 = vmatpush2.bf16.msra.mxu0 0
    %250 = vmatprep.subr.bf16.mxu0 0
    %251 = vmatpush2.bf16.msra.mxu0 0
    %252 = vmatprep.subr.bf16.mxu0 0
    %253 = vmatpush2.bf16.msra.mxu0 0
    %254 = vmatprep.mubr.bf16.mxu0 0
    %255 = vmatmul.mubr.bf16.gmra.mxu0 %v166
    %v256 = vpop.f32.mrf.mxu0
    %v257 = vadd.f32 0.0, %v256
    %v258 = vpop.f32.mrf.mxu0
    %v259 = vpop.f32.mrf.mxu0
    %v260 = vadd.f32 0.0, %v259
    %v261 = vpop.f32.mrf.mxu0
    %262 = vmatprep.mubr.bf16.mxu0 0
    %263 = vmatmul.mubr.bf16.gmra.mxu0 %v167
    %v264 = vpop.f32.mrf.mxu0
    %v265 = vadd.f32 0.0, %v264
    %v266 = vpop.f32.mrf.mxu0
    %v267 = vpop.f32.mrf.mxu0
    %v268 = vadd.f32 0.0, %v267
    %v269 = vpop.f32.mrf.mxu0
    %270 = vmatprep.mubr.bf16.mxu0 0
    %271 = vmatmul.mubr.bf16.gmra.mxu0 %v168
    %v272 = vpop.f32.mrf.mxu0
    %v273 = vadd.f32 0.0, %v272
    %v274 = vpop.f32.mrf.mxu0
    %v275 = vpop.f32.mrf.mxu0
    %v276 = vadd.f32 0.0, %v275
    %v277 = vpop.f32.mrf.mxu0
    %278 = vmatprep.mubr.bf16.mxu0 0
    %279 = vmatmul.mubr.bf16.gmra.mxu0 %v169
    %v280 = vpop.f32.mrf.mxu0
    %v281 = vadd.f32 0.0, %v280
    %v282 = vpop.f32.mrf.mxu0
    %v283 = vpop.f32.mrf.mxu0
    %v284 = vadd.f32 0.0, %v283
    %v285 = vpop.f32.mrf.mxu0
    %286 = vmatprep.mubr.bf16.mxu0 0
    %287 = vmatmul.mubr.bf16.gmra.mxu0 %v170
    %v288 = vpop.f32.mrf.mxu0
    %v289 = vadd.f32 0.0, %v288
    %v290 = vpop.f32.mrf.mxu0
    %v291 = vpop.f32.mrf.mxu0
    %v292 = vadd.f32 0.0, %v291
    %v293 = vpop.f32.mrf.mxu0
    %294 = vmatprep.mubr.bf16.mxu0 0
    %295 = vmatmul.mubr.bf16.gmra.mxu0 %v171
    %v296 = vpop.f32.mrf.mxu0
    %v297 = vadd.f32 0.0, %v296
    %v298 = vpop.f32.mrf.mxu0
    %v299 = vpop.f32.mrf.mxu0
    %v300 = vadd.f32 0.0, %v299
    %v301 = vpop.f32.mrf.mxu0
    %302 = vmatprep.mubr.bf16.mxu0 0
    %303 = vmatmul.mubr.bf16.gmra.mxu0 %v172
    %v304 = vpop.f32.mrf.mxu0
    %v305 = vadd.f32 0.0, %v304
    %v306 = vpop.f32.mrf.mxu0
    %v307 = vpop.f32.mrf.mxu0
    %v308 = vadd.f32 0.0, %v307
    %v309 = vpop.f32.mrf.mxu0
    %310 = vmatprep.mubr.bf16.mxu0 0
    %311 = vmatmul.mubr.bf16.gmra.mxu0 %v173
    %v312 = vpop.f32.mrf.mxu0
    %v313 = vadd.f32 0.0, %v312
    %v314 = vpop.f32.mrf.mxu0
    %v315 = vpop.f32.mrf.mxu0
    %v316 = vadd.f32 0.0, %v315
    %v317 = vpop.f32.mrf.mxu0
    %318 = vdwg.mxu0
    %v319 = vpack.c.bf16 %v260, %v257
    %v320 = vpack.c.bf16 %v268, %v265
    %v321 = vpack.c.bf16 %v276, %v273
    %v322 = vpack.c.bf16 %v284, %v281
    %v323 = vpack.c.bf16 %v292, %v289
    %v324 = vpack.c.bf16 %v300, %v297
    %v325 = vpack.c.bf16 %v308, %v305
    %v326 = vpack.c.bf16 %v316, %v313
    %v327 = vld [vmem:[%s2] sm:$0xf]
    %v328 = vld [vmem:[%s2 + $0x4] sm:$0xf]
    %v329 = vld [vmem:[%s2 + $0x8] sm:$0xf]
    %v330 = vld [vmem:[%s2 + $0xc] sm:$0xf]
    %331 = vset.pattern.permute.xlu0 1
    %332 = vperm.xlu0 %331, %v54
    %v333 = vpop.permute.xlu0 %332
    %334 = vset.pattern.permute.xlu0 1
    %335 = vperm.xlu0 %334, %v55
    %v336 = vpop.permute.xlu0 %335
    %337 = vset.pattern.permute.xlu0 1
    %338 = vperm.xlu0 %337, %v56
    %v339 = vpop.permute.xlu0 %338
    %340 = vset.pattern.permute.xlu0 1
    %341 = vperm.xlu0 %340, %v57
    %v342 = vpop.permute.xlu0 %341
    %343 = vset.pattern.permute.xlu0 1
    %344 = vperm.xlu0 %343, %v58
    %v345 = vpop.permute.xlu0 %344
    %346 = vset.pattern.permute.xlu0 1
    %347 = vperm.xlu0 %346, %v59
    %v348 = vpop.permute.xlu0 %347
    %349 = vset.pattern.permute.xlu0 1
    %350 = vperm.xlu0 %349, %v60
    %v351 = vpop.permute.xlu0 %350
    %352 = vset.pattern.permute.xlu0 1
    %353 = vperm.xlu0 %352, %v61
    %v354 = vpop.permute.xlu0 %353
    %355 = vset.pattern.permute.xlu0 1
    %356 = vperm.xlu0 %355, %v62
    %v357 = vpop.permute.xlu0 %356
    %358 = vset.pattern.permute.xlu0 1
    %359 = vperm.xlu0 %358, %v63
    %v360 = vpop.permute.xlu0 %359
    %361 = vset.pattern.permute.xlu0 1
    %362 = vperm.xlu0 %361, %v64
    %v363 = vpop.permute.xlu0 %362
    %364 = vset.pattern.permute.xlu0 1
    %365 = vperm.xlu0 %364, %v65
    %v366 = vpop.permute.xlu0 %365
    %367 = vset.pattern.permute.xlu0 1
    %368 = vperm.xlu0 %367, %v66
    %v369 = vpop.permute.xlu0 %368
    %370 = vset.pattern.permute.xlu0 1
    %371 = vperm.xlu0 %370, %v67
    %v372 = vpop.permute.xlu0 %371
    %373 = vset.pattern.permute.xlu0 1
    %374 = vperm.xlu0 %373, %v68
    %v375 = vpop.permute.xlu0 %374
    %376 = vset.pattern.permute.xlu0 1
    %377 = vperm.xlu0 %376, %v69
    %v378 = vpop.permute.xlu0 %377
    %vm379 = vcmp.eq.s32.totalorder %v333, %v53
    %vm380 = vcmp.eq.s32.totalorder %v336, %v53
    %vm381 = vcmp.eq.s32.totalorder %v339, %v53
    %vm382 = vcmp.eq.s32.totalorder %v342, %v53
    %vm383 = vcmp.eq.s32.totalorder %v345, %v53
    %vm384 = vcmp.eq.s32.totalorder %v348, %v53
    %vm385 = vcmp.eq.s32.totalorder %v351, %v53
    %vm386 = vcmp.eq.s32.totalorder %v354, %v53
    %vm387 = vcmp.eq.s32.totalorder %v357, %v53
    %vm388 = vcmp.eq.s32.totalorder %v360, %v53
    %vm389 = vcmp.eq.s32.totalorder %v363, %v53
    %vm390 = vcmp.eq.s32.totalorder %v366, %v53
    %vm391 = vcmp.eq.s32.totalorder %v369, %v53
    %vm392 = vcmp.eq.s32.totalorder %v372, %v53
    %vm393 = vcmp.eq.s32.totalorder %v375, %v53
    %vm394 = vcmp.eq.s32.totalorder %v378, %v53
    %v395 = vsel %vm379, 1, 0
    %v396 = vsel %vm380, 1, 0
    %v397 = vsel %vm381, 1, 0
    %v398 = vsel %vm382, 1, 0
    %v399 = vsel %vm383, 1, 0
    %v400 = vsel %vm384, 1, 0
    %v401 = vsel %vm385, 1, 0
    %v402 = vsel %vm386, 1, 0
    %v403 = vsel %vm387, 1, 0
    %v404 = vsel %vm388, 1, 0
    %v405 = vsel %vm389, 1, 0
    %v406 = vsel %vm390, 1, 0
    %v407 = vsel %vm391, 1, 0
    %v408 = vsel %vm392, 1, 0
    %v409 = vsel %vm393, 1, 0
    %v410 = vsel %vm394, 1, 0
    %v411 = vcvt.s32.f32 %v395
    %v412 = vcvt.s32.f32 %v396
    %v413 = vcvt.s32.f32 %v397
    %v414 = vcvt.s32.f32 %v398
    %v415 = vcvt.s32.f32 %v399
    %v416 = vcvt.s32.f32 %v400
    %v417 = vcvt.s32.f32 %v401
    %v418 = vcvt.s32.f32 %v402
    %v419 = vcvt.s32.f32 %v403
    %v420 = vcvt.s32.f32 %v404
    %v421 = vcvt.s32.f32 %v405
    %v422 = vcvt.s32.f32 %v406
    %v423 = vcvt.s32.f32 %v407
    %v424 = vcvt.s32.f32 %v408
    %v425 = vcvt.s32.f32 %v409
    %v426 = vcvt.s32.f32 %v410
    %v427 = vpack.c.bf16 %v412, %v411
    %v428 = vpack.c.bf16 %v414, %v413
    %v429 = vpack.c.bf16 %v416, %v415
    %v430 = vpack.c.bf16 %v418, %v417
    %v431 = vpack.c.bf16 %v420, %v419
    %v432 = vpack.c.bf16 %v422, %v421
    %v433 = vpack.c.bf16 %v424, %v423
    %v434 = vpack.c.bf16 %v426, %v425
    %435 = vmatprep.subr.bf16.mxu0 0
    %436 = vmatpush1.bf16.msra.mxu0 %v213
    %437 = vmatprep.subr.bf16.mxu0 0
    %438 = vmatpush1.bf16.msra.mxu0 %v212
    %439 = vmatprep.subr.bf16.mxu0 0
    %440 = vmatpush1.bf16.msra.mxu0 %v211
    %441 = vmatprep.subr.bf16.mxu0 0
    %442 = vmatpush1.bf16.msra.mxu0 %v210
    %443 = vmatprep.subr.bf16.mxu0 0
    %444 = vmatpush1.bf16.msra.mxu0 %v209
    %445 = vmatprep.subr.bf16.mxu0 0
    %446 = vmatpush1.bf16.msra.mxu0 %v208
    %447 = vmatprep.subr.bf16.mxu0 0
    %448 = vmatpush1.bf16.msra.mxu0 %v207
    %449 = vmatprep.subr.bf16.mxu0 0
    %450 = vmatpush1.bf16.msra.mxu0 %v206
    %451 = vmatprep.subr.bf16.mxu0 0
    %452 = vmatpush2.bf16.msra.mxu0 0
    %453 = vmatprep.subr.bf16.mxu0 0
    %454 = vmatpush2.bf16.msra.mxu0 0
    %455 = vmatprep.subr.bf16.mxu0 0
    %456 = vmatpush2.bf16.msra.mxu0 0
    %457 = vmatprep.subr.bf16.mxu0 0
    %458 = vmatpush2.bf16.msra.mxu0 0
    %459 = vmatprep.subr.bf16.mxu0 0
    %460 = vmatpush2.bf16.msra.mxu0 0
    %461 = vmatprep.subr.bf16.mxu0 0
    %462 = vmatpush2.bf16.msra.mxu0 0
    %463 = vmatprep.subr.bf16.mxu0 0
    %464 = vmatpush2.bf16.msra.mxu0 0
    %465 = vmatprep.subr.bf16.mxu0 0
    %466 = vmatpush2.bf16.msra.mxu0 0
    %467 = vmatprep.mubr.bf16.mxu0 0
    %468 = vmatmul.mubr.bf16.gmra.mxu0 %v427
    %v469 = vpop.f32.mrf.mxu0
    %v470 = vadd.f32 0.0, %v469
    %v471 = vpop.f32.mrf.mxu0
    %v472 = vpop.f32.mrf.mxu0
    %v473 = vadd.f32 0.0, %v472
    %v474 = vpop.f32.mrf.mxu0
    %475 = vmatprep.mubr.bf16.mxu0 0
    %476 = vmatmul.mubr.bf16.gmra.mxu0 %v428
    %v477 = vpop.f32.mrf.mxu0
    %v478 = vadd.f32 0.0, %v477
    %v479 = vpop.f32.mrf.mxu0
    %v480 = vpop.f32.mrf.mxu0
    %v481 = vadd.f32 0.0, %v480
    %v482 = vpop.f32.mrf.mxu0
    %483 = vmatprep.mubr.bf16.mxu0 0
    %484 = vmatmul.mubr.bf16.gmra.mxu0 %v429
    %v485 = vpop.f32.mrf.mxu0
    %v486 = vadd.f32 0.0, %v485
    %v487 = vpop.f32.mrf.mxu0
    %v488 = vpop.f32.mrf.mxu0
    %v489 = vadd.f32 0.0, %v488
    %v490 = vpop.f32.mrf.mxu0
    %491 = vmatprep.mubr.bf16.mxu0 0
    %492 = vmatmul.mubr.bf16.gmra.mxu0 %v430
    %v493 = vpop.f32.mrf.mxu0
    %v494 = vadd.f32 0.0, %v493
    %v495 = vpop.f32.mrf.mxu0
    %v496 = vpop.f32.mrf.mxu0
    %v497 = vadd.f32 0.0, %v496
    %v498 = vpop.f32.mrf.mxu0
    %499 = vmatprep.mubr.bf16.mxu0 0
    %500 = vmatmul.mubr.bf16.gmra.mxu0 %v431
    %v501 = vpop.f32.mrf.mxu0
    %v502 = vadd.f32 0.0, %v501
    %v503 = vpop.f32.mrf.mxu0
    %v504 = vpop.f32.mrf.mxu0
    %v505 = vadd.f32 0.0, %v504
    %v506 = vpop.f32.mrf.mxu0
    %507 = vmatprep.mubr.bf16.mxu0 0
    %508 = vmatmul.mubr.bf16.gmra.mxu0 %v432
    %v509 = vpop.f32.mrf.mxu0
    %v510 = vadd.f32 0.0, %v509
    %v511 = vpop.f32.mrf.mxu0
    %v512 = vpop.f32.mrf.mxu0
    %v513 = vadd.f32 0.0, %v512
    %v514 = vpop.f32.mrf.mxu0
    %515 = vmatprep.mubr.bf16.mxu0 0
    %516 = vmatmul.mubr.bf16.gmra.mxu0 %v433
    %v517 = vpop.f32.mrf.mxu0
    %v518 = vadd.f32 0.0, %v517
    %v519 = vpop.f32.mrf.mxu0
    %v520 = vpop.f32.mrf.mxu0
    %v521 = vadd.f32 0.0, %v520
    %v522 = vpop.f32.mrf.mxu0
    %523 = vmatprep.mubr.bf16.mxu0 0
    %524 = vmatmul.mubr.bf16.gmra.mxu0 %v434
    %v525 = vpop.f32.mrf.mxu0
    %v526 = vadd.f32 0.0, %v525
    %v527 = vpop.f32.mrf.mxu0
    %v528 = vpop.f32.mrf.mxu0
    %v529 = vadd.f32 0.0, %v528
    %v530 = vpop.f32.mrf.mxu0
    %531 = vdwg.mxu0
    %v532 = vpack.c.bf16 %v473, %v470
    %v533 = vpack.c.bf16 %v481, %v478
    %v534 = vpack.c.bf16 %v489, %v486
    %v535 = vpack.c.bf16 %v497, %v494
    %v536 = vpack.c.bf16 %v505, %v502
    %v537 = vpack.c.bf16 %v513, %v510
    %v538 = vpack.c.bf16 %v521, %v518
    %v539 = vpack.c.bf16 %v529, %v526
    %v540 = vld [vmem:[%s2 + $0x10] sm:$0xf]
    %v541 = vld [vmem:[%s2 + $0x14] sm:$0xf]
    %v542 = vld [vmem:[%s2 + $0x18] sm:$0xf]
    %v543 = vld [vmem:[%s2 + $0x1c] sm:$0xf]
    %v548 = vunpack.c.l.b16 %v540
    %v549 = vunpack.c.l.b16 %v541
    %v550 = vunpack.c.l.b16 %v542
    %v551 = vunpack.c.l.b16 %v543
    %v552 = vpack.c.b16 %v549, %v548
    %v553 = vpack.c.b16 %v551, %v550
    %vm556 = vcmask 261120
    %v558 = vsel %vm556, %v532, 0
    %v561 = vsel %vm556, %v533, 0
    %v564 = vsel %vm556, %v534, 0
    %v567 = vsel %vm556, %v535, 0
    %v570 = vsel %vm556, %v536, 0
    %v573 = vsel %vm556, %v537, 0
    %v576 = vsel %vm556, %v538, 0
    %v579 = vsel %vm556, %v539, 0
    %581 = vmatprep.subr.bf16.mxu0 0
    %582 = vmatpush1.bf16.msra.mxu0 0
    %583 = vmatprep.subr.bf16.mxu0 0
    %584 = vmatpush1.bf16.msra.mxu0 0
    %585 = vmatprep.subr.bf16.mxu0 0
    %586 = vmatpush1.bf16.msra.mxu0 0
    %587 = vmatprep.subr.bf16.mxu0 0
    %588 = vmatpush1.bf16.msra.mxu0 0
    %589 = vmatprep.subr.bf16.mxu0 0
    %590 = vmatpush1.bf16.msra.mxu0 0
    %591 = vmatprep.subr.bf16.mxu0 0
    %592 = vmatpush1.bf16.msra.mxu0 0
    %593 = vmatprep.subr.bf16.mxu0 0
    %594 = vmatpush1.bf16.msra.mxu0 %v553
    %595 = vmatprep.subr.bf16.mxu0 0
    %596 = vmatpush1.bf16.msra.mxu0 %v552
    %597 = vmatprep.subr.bf16.mxu0 0
    %598 = vmatpush2.bf16.msra.mxu0 0
    %599 = vmatprep.subr.bf16.mxu0 0
    %600 = vmatpush2.bf16.msra.mxu0 0
    %601 = vmatprep.subr.bf16.mxu0 0
    %602 = vmatpush2.bf16.msra.mxu0 0
    %603 = vmatprep.subr.bf16.mxu0 0
    %604 = vmatpush2.bf16.msra.mxu0 0
    %605 = vmatprep.subr.bf16.mxu0 0
    %606 = vmatpush2.bf16.msra.mxu0 0
    %607 = vmatprep.subr.bf16.mxu0 0
    %608 = vmatpush2.bf16.msra.mxu0 0
    %609 = vmatprep.subr.bf16.mxu0 0
    %610 = vmatpush2.bf16.msra.mxu0 0
    %611 = vmatprep.subr.bf16.mxu0 0
    %612 = vmatpush2.bf16.msra.mxu0 0
    %613 = vmatprep.mubr.bf16.mxu0 0
    %614 = vmatmul.mubr.bf16.gmra.mxu0 %v558
    %v615 = vpop.f32.mrf.mxu0
    %v616 = vadd.f32 0.0, %v615
    %v617 = vpop.f32.mrf.mxu0
    %v618 = vpop.f32.mrf.mxu0
    %v619 = vadd.f32 0.0, %v618
    %v620 = vpop.f32.mrf.mxu0
    %621 = vmatprep.mubr.bf16.mxu0 0
    %622 = vmatmul.mubr.bf16.gmra.mxu0 %v561
    %v623 = vpop.f32.mrf.mxu0
    %v624 = vadd.f32 0.0, %v623
    %v625 = vpop.f32.mrf.mxu0
    %v626 = vpop.f32.mrf.mxu0
    %v627 = vadd.f32 0.0, %v626
    %v628 = vpop.f32.mrf.mxu0
    %629 = vmatprep.mubr.bf16.mxu0 0
    %630 = vmatmul.mubr.bf16.gmra.mxu0 %v564
    %v631 = vpop.f32.mrf.mxu0
    %v632 = vadd.f32 0.0, %v631
    %v633 = vpop.f32.mrf.mxu0
    %v634 = vpop.f32.mrf.mxu0
    %v635 = vadd.f32 0.0, %v634
    %v636 = vpop.f32.mrf.mxu0
    %637 = vmatprep.mubr.bf16.mxu0 0
    %638 = vmatmul.mubr.bf16.gmra.mxu0 %v567
    %v639 = vpop.f32.mrf.mxu0
    %v640 = vadd.f32 0.0, %v639
    %v641 = vpop.f32.mrf.mxu0
    %v642 = vpop.f32.mrf.mxu0
    %v643 = vadd.f32 0.0, %v642
    %v644 = vpop.f32.mrf.mxu0
    %645 = vmatprep.mubr.bf16.mxu0 0
    %646 = vmatmul.mubr.bf16.gmra.mxu0 %v570
    %v647 = vpop.f32.mrf.mxu0
    %v648 = vadd.f32 0.0, %v647
    %v649 = vpop.f32.mrf.mxu0
    %v650 = vpop.f32.mrf.mxu0
    %v651 = vadd.f32 0.0, %v650
    %v652 = vpop.f32.mrf.mxu0
    %653 = vmatprep.mubr.bf16.mxu0 0
    %654 = vmatmul.mubr.bf16.gmra.mxu0 %v573
    %v655 = vpop.f32.mrf.mxu0
    %v656 = vadd.f32 0.0, %v655
    %v657 = vpop.f32.mrf.mxu0
    %v658 = vpop.f32.mrf.mxu0
    %v659 = vadd.f32 0.0, %v658
    %v660 = vpop.f32.mrf.mxu0
    %661 = vmatprep.mubr.bf16.mxu0 0
    %662 = vmatmul.mubr.bf16.gmra.mxu0 %v576
    %v663 = vpop.f32.mrf.mxu0
    %v664 = vadd.f32 0.0, %v663
    %v665 = vpop.f32.mrf.mxu0
    %v666 = vpop.f32.mrf.mxu0
    %v667 = vadd.f32 0.0, %v666
    %v668 = vpop.f32.mrf.mxu0
    %669 = vmatprep.mubr.bf16.mxu0 0
    %670 = vmatmul.mubr.bf16.gmra.mxu0 %v579
    %v671 = vpop.f32.mrf.mxu0
    %v672 = vadd.f32 0.0, %v671
    %v673 = vpop.f32.mrf.mxu0
    %v674 = vpop.f32.mrf.mxu0
    %v675 = vadd.f32 0.0, %v674
    %v676 = vpop.f32.mrf.mxu0
    %677 = vdwg.mxu0
    %v682 = vunpack.c.l.b16 %v327
    %v683 = vunpack.c.l.b16 %v328
    %v684 = vunpack.c.l.b16 %v329
    %v685 = vunpack.c.l.b16 %v330
    %v686 = vpack.c.b16 %v683, %v682
    %v687 = vpack.c.b16 %v685, %v684
    %v691 = vsel %vm556, %v319, 0
    %v694 = vsel %vm556, %v320, 0
    %v697 = vsel %vm556, %v321, 0
    %v700 = vsel %vm556, %v322, 0
    %v703 = vsel %vm556, %v323, 0
    %v706 = vsel %vm556, %v324, 0
    %v709 = vsel %vm556, %v325, 0
    %v712 = vsel %vm556, %v326, 0
    %714 = vmatprep.subr.bf16.mxu0 0
    %715 = vmatpush1.bf16.msra.mxu0 0
    %716 = vmatprep.subr.bf16.mxu0 0
    %717 = vmatpush1.bf16.msra.mxu0 0
    %718 = vmatprep.subr.bf16.mxu0 0
    %719 = vmatpush1.bf16.msra.mxu0 0
    %720 = vmatprep.subr.bf16.mxu0 0
    %721 = vmatpush1.bf16.msra.mxu0 0
    %722 = vmatprep.subr.bf16.mxu0 0
    %723 = vmatpush1.bf16.msra.mxu0 0
    %724 = vmatprep.subr.bf16.mxu0 0
    %725 = vmatpush1.bf16.msra.mxu0 0
    %726 = vmatprep.subr.bf16.mxu0 0
    %727 = vmatpush1.bf16.msra.mxu0 %v687
    %728 = vmatprep.subr.bf16.mxu0 0
    %729 = vmatpush1.bf16.msra.mxu0 %v686
    %730 = vmatprep.subr.bf16.mxu0 0
    %731 = vmatpush2.bf16.msra.mxu0 0
    %732 = vmatprep.subr.bf16.mxu0 0
    %733 = vmatpush2.bf16.msra.mxu0 0
    %734 = vmatprep.subr.bf16.mxu0 0
    %735 = vmatpush2.bf16.msra.mxu0 0
    %736 = vmatprep.subr.bf16.mxu0 0
    %737 = vmatpush2.bf16.msra.mxu0 0
    %738 = vmatprep.subr.bf16.mxu0 0
    %739 = vmatpush2.bf16.msra.mxu0 0
    %740 = vmatprep.subr.bf16.mxu0 0
    %741 = vmatpush2.bf16.msra.mxu0 0
    %742 = vmatprep.subr.bf16.mxu0 0
    %743 = vmatpush2.bf16.msra.mxu0 0
    %744 = vmatprep.subr.bf16.mxu0 0
    %745 = vmatpush2.bf16.msra.mxu0 0
    %746 = vmatprep.mubr.bf16.mxu0 0
    %747 = vmatmul.mubr.bf16.gmra.mxu0 %v691
    %v748 = vpop.f32.mrf.mxu0
    %v749 = vadd.f32 %v616, %v748
    %v750 = vpop.f32.mrf.mxu0
    %v751 = vpop.f32.mrf.mxu0
    %v752 = vadd.f32 %v619, %v751
    %v753 = vpop.f32.mrf.mxu0
    %754 = vmatprep.mubr.bf16.mxu0 0
    %755 = vmatmul.mubr.bf16.gmra.mxu0 %v694
    %v756 = vpop.f32.mrf.mxu0
    %v757 = vadd.f32 %v624, %v756
    %v758 = vpop.f32.mrf.mxu0
    %v759 = vpop.f32.mrf.mxu0
    %v760 = vadd.f32 %v627, %v759
    %v761 = vpop.f32.mrf.mxu0
    %762 = vmatprep.mubr.bf16.mxu0 0
    %763 = vmatmul.mubr.bf16.gmra.mxu0 %v697
    %v764 = vpop.f32.mrf.mxu0
    %v765 = vadd.f32 %v632, %v764
    %v766 = vpop.f32.mrf.mxu0
    %v767 = vpop.f32.mrf.mxu0
    %v768 = vadd.f32 %v635, %v767
    %v769 = vpop.f32.mrf.mxu0
    %770 = vmatprep.mubr.bf16.mxu0 0
    %771 = vmatmul.mubr.bf16.gmra.mxu0 %v700
    %v772 = vpop.f32.mrf.mxu0
    %v773 = vadd.f32 %v640, %v772
    %v774 = vpop.f32.mrf.mxu0
    %v775 = vpop.f32.mrf.mxu0
    %v776 = vadd.f32 %v643, %v775
    %v777 = vpop.f32.mrf.mxu0
    %778 = vmatprep.mubr.bf16.mxu0 0
    %779 = vmatmul.mubr.bf16.gmra.mxu0 %v703
    %v780 = vpop.f32.mrf.mxu0
    %v781 = vadd.f32 %v648, %v780
    %v782 = vpop.f32.mrf.mxu0
    %v783 = vpop.f32.mrf.mxu0
    %v784 = vadd.f32 %v651, %v783
    %v785 = vpop.f32.mrf.mxu0
    %786 = vmatprep.mubr.bf16.mxu0 0
    %787 = vmatmul.mubr.bf16.gmra.mxu0 %v706
    %v788 = vpop.f32.mrf.mxu0
    %v789 = vadd.f32 %v656, %v788
    %v790 = vpop.f32.mrf.mxu0
    %v791 = vpop.f32.mrf.mxu0
    %v792 = vadd.f32 %v659, %v791
    %v793 = vpop.f32.mrf.mxu0
    %794 = vmatprep.mubr.bf16.mxu0 0
    %795 = vmatmul.mubr.bf16.gmra.mxu0 %v709
    %v796 = vpop.f32.mrf.mxu0
    %v797 = vadd.f32 %v664, %v796
    %v798 = vpop.f32.mrf.mxu0
    %v799 = vpop.f32.mrf.mxu0
    %v800 = vadd.f32 %v667, %v799
    %v801 = vpop.f32.mrf.mxu0
    %802 = vmatprep.mubr.bf16.mxu0 0
    %803 = vmatmul.mubr.bf16.gmra.mxu0 %v712
    %v804 = vpop.f32.mrf.mxu0
    %v805 = vadd.f32 %v672, %v804
    %v806 = vpop.f32.mrf.mxu0
    %v807 = vpop.f32.mrf.mxu0
    %v808 = vadd.f32 %v675, %v807
    %v809 = vpop.f32.mrf.mxu0
    %810 = vdwg.mxu0
    %v811 = vld [vmem:[%s3] sm:$0x1]
    %v813 = vlaneseq
    %v814 = vshrl.u32 %v813, 7
    %v815 = vsub.s32 0, %v814
    %v816 = vrot.slane %v811, %v815
    %v818 = vadd.f32 %v749, %v816
    %v819 = vadd.f32 %v752, %v816
    %v820 = vadd.f32 %v757, %v816
    %v821 = vadd.f32 %v760, %v816
    %v822 = vadd.f32 %v765, %v816
    %v823 = vadd.f32 %v768, %v816
    %v824 = vadd.f32 %v773, %v816
    %v825 = vadd.f32 %v776, %v816
    %v826 = vadd.f32 %v781, %v816
    %v827 = vadd.f32 %v784, %v816
    %v828 = vadd.f32 %v789, %v816
    %v829 = vadd.f32 %v792, %v816
    %v830 = vadd.f32 %v797, %v816
    %v831 = vadd.f32 %v800, %v816
    %v832 = vadd.f32 %v805, %v816
    %v833 = vadd.f32 %v808, %v816
    %v834 = vmax.f32 %v818, 0.0
    %v835 = vmax.f32 %v819, 0.0
    %v836 = vmax.f32 %v820, 0.0
    %v837 = vmax.f32 %v821, 0.0
    %v838 = vmax.f32 %v822, 0.0
    %v839 = vmax.f32 %v823, 0.0
    %v840 = vmax.f32 %v824, 0.0
    %v841 = vmax.f32 %v825, 0.0
    %v842 = vmax.f32 %v826, 0.0
    %v843 = vmax.f32 %v827, 0.0
    %v844 = vmax.f32 %v828, 0.0
    %v845 = vmax.f32 %v829, 0.0
    %v846 = vmax.f32 %v830, 0.0
    %v847 = vmax.f32 %v831, 0.0
    %v848 = vmax.f32 %v832, 0.0
    %v849 = vmax.f32 %v833, 0.0
    %v850 = vpack.c.bf16 %v835, %v834
    %v851 = vpack.c.bf16 %v837, %v836
    %v852 = vpack.c.bf16 %v839, %v838
    %v853 = vpack.c.bf16 %v841, %v840
    %v854 = vpack.c.bf16 %v843, %v842
    %v855 = vpack.c.bf16 %v845, %v844
    %v856 = vpack.c.bf16 %v847, %v846
    %v857 = vpack.c.bf16 %v849, %v848
    %v858 = vld [vmem:[%s4] sm:$0xf]
    %v859 = vld [vmem:[%s4 + $0x4] sm:$0xf]
    %v860 = vld [vmem:[%s4 + $0x8] sm:$0xf]
    %v861 = vld [vmem:[%s4 + $0xc] sm:$0xf]
    %v862 = vld [vmem:[%s4 + $0x10] sm:$0xf]
    %v863 = vld [vmem:[%s4 + $0x14] sm:$0xf]
    %v864 = vld [vmem:[%s4 + $0x18] sm:$0xf]
    %v865 = vld [vmem:[%s4 + $0x1c] sm:$0xf]
    %v866 = vld [vmem:[%s4 + $0x20] sm:$0xf]
    %v867 = vld [vmem:[%s4 + $0x24] sm:$0xf]
    %v868 = vld [vmem:[%s4 + $0x28] sm:$0xf]
    %v869 = vld [vmem:[%s4 + $0x2c] sm:$0xf]
    %v870 = vld [vmem:[%s4 + $0x30] sm:$0xf]
    %v871 = vld [vmem:[%s4 + $0x34] sm:$0xf]
    %v872 = vld [vmem:[%s4 + $0x38] sm:$0xf]
    %v873 = vld [vmem:[%s4 + $0x3c] sm:$0xf]
    %v874 = vld [vmem:[%s5] sm:$0x1]
    %v876 = vlaneseq
    %v877 = vshrl.u32 %v876, 7
    %v878 = vsub.s32 0, %v877
    %v879 = vrot.slane %v874, %v878
    %v897 = vunpack.c.l.b16 %v858
    %v898 = vunpack.c.l.b16 %v859
    %v899 = vunpack.c.l.b16 %v860
    %v900 = vunpack.c.l.b16 %v861
    %v901 = vunpack.c.l.b16 %v862
    %v902 = vunpack.c.l.b16 %v863
    %v903 = vunpack.c.l.b16 %v864
    %v904 = vunpack.c.l.b16 %v865
    %v905 = vunpack.c.l.b16 %v866
    %v906 = vunpack.c.l.b16 %v867
    %v907 = vunpack.c.l.b16 %v868
    %v908 = vunpack.c.l.b16 %v869
    %v909 = vunpack.c.l.b16 %v870
    %v910 = vunpack.c.l.b16 %v871
    %v911 = vunpack.c.l.b16 %v872
    %v912 = vunpack.c.l.b16 %v873
    %v913 = vpack.c.b16 %v898, %v897
    %v914 = vpack.c.b16 %v900, %v899
    %v915 = vpack.c.b16 %v902, %v901
    %v916 = vpack.c.b16 %v904, %v903
    %v917 = vpack.c.b16 %v906, %v905
    %v918 = vpack.c.b16 %v908, %v907
    %v919 = vpack.c.b16 %v910, %v909
    %v920 = vpack.c.b16 %v912, %v911
    %929 = vmatprep.subr.bf16.mxu0 0
    %930 = vmatpush1.bf16.msra.mxu0 %v920
    %931 = vmatprep.subr.bf16.mxu0 0
    %932 = vmatpush1.bf16.msra.mxu0 %v919
    %933 = vmatprep.subr.bf16.mxu0 0
    %934 = vmatpush1.bf16.msra.mxu0 %v918
    %935 = vmatprep.subr.bf16.mxu0 0
    %936 = vmatpush1.bf16.msra.mxu0 %v917
    %937 = vmatprep.subr.bf16.mxu0 0
    %938 = vmatpush1.bf16.msra.mxu0 %v916
    %939 = vmatprep.subr.bf16.mxu0 0
    %940 = vmatpush1.bf16.msra.mxu0 %v915
    %941 = vmatprep.subr.bf16.mxu0 0
    %942 = vmatpush1.bf16.msra.mxu0 %v914
    %943 = vmatprep.subr.bf16.mxu0 0
    %944 = vmatpush1.bf16.msra.mxu0 %v913
    %945 = vmatprep.subr.bf16.mxu0 0
    %946 = vmatpush2.bf16.msra.mxu0 0
    %947 = vmatprep.subr.bf16.mxu0 0
    %948 = vmatpush2.bf16.msra.mxu0 0
    %949 = vmatprep.subr.bf16.mxu0 0
    %950 = vmatpush2.bf16.msra.mxu0 0
    %951 = vmatprep.subr.bf16.mxu0 0
    %952 = vmatpush2.bf16.msra.mxu0 0
    %953 = vmatprep.subr.bf16.mxu0 0
    %954 = vmatpush2.bf16.msra.mxu0 0
    %955 = vmatprep.subr.bf16.mxu0 0
    %956 = vmatpush2.bf16.msra.mxu0 0
    %957 = vmatprep.subr.bf16.mxu0 0
    %958 = vmatpush2.bf16.msra.mxu0 0
    %959 = vmatprep.subr.bf16.mxu0 0
    %960 = vmatpush2.bf16.msra.mxu0 0
    %961 = vmatprep.mubr.bf16.mxu0 0
    %962 = vmatmul.mubr.bf16.gmra.mxu0 %v850
    %v963 = vpop.f32.mrf.mxu0
    %v964 = vadd.f32 %v879, %v963
    %v965 = vpop.f32.mrf.mxu0
    %v966 = vpop.f32.mrf.mxu0
    %v967 = vadd.f32 %v879, %v966
    %v968 = vpop.f32.mrf.mxu0
    %969 = vmatprep.mubr.bf16.mxu0 0
    %970 = vmatmul.mubr.bf16.gmra.mxu0 %v851
    %v971 = vpop.f32.mrf.mxu0
    %v972 = vadd.f32 %v879, %v971
    %v973 = vpop.f32.mrf.mxu0
    %v974 = vpop.f32.mrf.mxu0
    %v975 = vadd.f32 %v879, %v974
    %v976 = vpop.f32.mrf.mxu0
    %977 = vmatprep.mubr.bf16.mxu0 0
    %978 = vmatmul.mubr.bf16.gmra.mxu0 %v852
    %v979 = vpop.f32.mrf.mxu0
    %v980 = vadd.f32 %v879, %v979
    %v981 = vpop.f32.mrf.mxu0
    %v982 = vpop.f32.mrf.mxu0
    %v983 = vadd.f32 %v879, %v982
    %v984 = vpop.f32.mrf.mxu0
    %985 = vmatprep.mubr.bf16.mxu0 0
    %986 = vmatmul.mubr.bf16.gmra.mxu0 %v853
    %v987 = vpop.f32.mrf.mxu0
    %v988 = vadd.f32 %v879, %v987
    %v989 = vpop.f32.mrf.mxu0
    %v990 = vpop.f32.mrf.mxu0
    %v991 = vadd.f32 %v879, %v990
    %v992 = vpop.f32.mrf.mxu0
    %993 = vmatprep.mubr.bf16.mxu0 0
    %994 = vmatmul.mubr.bf16.gmra.mxu0 %v854
    %v995 = vpop.f32.mrf.mxu0
    %v996 = vadd.f32 %v879, %v995
    %v997 = vpop.f32.mrf.mxu0
    %v998 = vpop.f32.mrf.mxu0
    %v999 = vadd.f32 %v879, %v998
    %v1000 = vpop.f32.mrf.mxu0
    %1001 = vmatprep.mubr.bf16.mxu0 0
    %1002 = vmatmul.mubr.bf16.gmra.mxu0 %v855
    %v1003 = vpop.f32.mrf.mxu0
    %v1004 = vadd.f32 %v879, %v1003
    %v1005 = vpop.f32.mrf.mxu0
    %v1006 = vpop.f32.mrf.mxu0
    %v1007 = vadd.f32 %v879, %v1006
    %v1008 = vpop.f32.mrf.mxu0
    %1009 = vmatprep.mubr.bf16.mxu0 0
    %1010 = vmatmul.mubr.bf16.gmra.mxu0 %v856
    %v1011 = vpop.f32.mrf.mxu0
    %v1012 = vadd.f32 %v879, %v1011
    %v1013 = vpop.f32.mrf.mxu0
    %v1014 = vpop.f32.mrf.mxu0
    %v1015 = vadd.f32 %v879, %v1014
    %v1016 = vpop.f32.mrf.mxu0
    %1017 = vmatprep.mubr.bf16.mxu0 0
    %1018 = vmatmul.mubr.bf16.gmra.mxu0 %v857
    %v1019 = vpop.f32.mrf.mxu0
    %v1020 = vadd.f32 %v879, %v1019
    %v1021 = vpop.f32.mrf.mxu0
    %v1022 = vpop.f32.mrf.mxu0
    %v1023 = vadd.f32 %v879, %v1022
    %v1024 = vpop.f32.mrf.mxu0
    %1025 = vdwg.mxu0
    %v1026 = vmax.f32 %v964, 0.0
    %v1027 = vmax.f32 %v967, 0.0
    %v1028 = vmax.f32 %v972, 0.0
    %v1029 = vmax.f32 %v975, 0.0
    %v1030 = vmax.f32 %v980, 0.0
    %v1031 = vmax.f32 %v983, 0.0
    %v1032 = vmax.f32 %v988, 0.0
    %v1033 = vmax.f32 %v991, 0.0
    %v1034 = vmax.f32 %v996, 0.0
    %v1035 = vmax.f32 %v999, 0.0
    %v1036 = vmax.f32 %v1004, 0.0
    %v1037 = vmax.f32 %v1007, 0.0
    %v1038 = vmax.f32 %v1012, 0.0
    %v1039 = vmax.f32 %v1015, 0.0
    %v1040 = vmax.f32 %v1020, 0.0
    %v1041 = vmax.f32 %v1023, 0.0
    %v1042 = vmul.f32 %v257, %v470
    %v1043 = vmul.f32 %v260, %v473
    %v1044 = vmul.f32 %v265, %v478
    %v1045 = vmul.f32 %v268, %v481
    %v1046 = vmul.f32 %v273, %v486
    %v1047 = vmul.f32 %v276, %v489
    %v1048 = vmul.f32 %v281, %v494
    %v1049 = vmul.f32 %v284, %v497
    %v1050 = vmul.f32 %v289, %v502
    %v1051 = vmul.f32 %v292, %v505
    %v1052 = vmul.f32 %v297, %v510
    %v1053 = vmul.f32 %v300, %v513
    %v1054 = vmul.f32 %v305, %v518
    %v1055 = vmul.f32 %v308, %v521
    %v1056 = vmul.f32 %v313, %v526
    %v1057 = vmul.f32 %v316, %v529
    %v1058 = vld [vmem:[%s6] sm:$0x1]
    %v1060 = vlaneseq
    %v1061 = vshrl.u32 %v1060, 7
    %v1062 = vsub.s32 0, %v1061
    %v1063 = vrot.slane %v1058, %v1062
    %v1065 = vmul.f32 %v1042, %v1063
    %v1066 = vmul.f32 %v1043, %v1063
    %v1067 = vmul.f32 %v1044, %v1063
    %v1068 = vmul.f32 %v1045, %v1063
    %v1069 = vmul.f32 %v1046, %v1063
    %v1070 = vmul.f32 %v1047, %v1063
    %v1071 = vmul.f32 %v1048, %v1063
    %v1072 = vmul.f32 %v1049, %v1063
    %v1073 = vmul.f32 %v1050, %v1063
    %v1074 = vmul.f32 %v1051, %v1063
    %v1075 = vmul.f32 %v1052, %v1063
    %v1076 = vmul.f32 %v1053, %v1063
    %v1077 = vmul.f32 %v1054, %v1063
    %v1078 = vmul.f32 %v1055, %v1063
    %v1079 = vmul.f32 %v1056, %v1063
    %v1080 = vmul.f32 %v1057, %v1063
    %v1081 = vsel %vm556, %v1065, 0.0
    %1082 = vadd.xlane.f32.xlu0 %v1081
    %v1083 = vpop.xlane.xlu0 %1082
    %v1084 = vsel %vm556, %v1066, 0.0
    %1085 = vadd.xlane.f32.xlu0 %v1084
    %v1086 = vpop.xlane.xlu0 %1085
    %v1087 = vsel %vm556, %v1067, 0.0
    %1088 = vadd.xlane.f32.xlu0 %v1087
    %v1089 = vpop.xlane.xlu0 %1088
    %v1090 = vsel %vm556, %v1068, 0.0
    %1091 = vadd.xlane.f32.xlu0 %v1090
    %v1092 = vpop.xlane.xlu0 %1091
    %v1093 = vsel %vm556, %v1069, 0.0
    %1094 = vadd.xlane.f32.xlu0 %v1093
    %v1095 = vpop.xlane.xlu0 %1094
    %v1096 = vsel %vm556, %v1070, 0.0
    %1097 = vadd.xlane.f32.xlu0 %v1096
    %v1098 = vpop.xlane.xlu0 %1097
    %v1099 = vsel %vm556, %v1071, 0.0
    %1100 = vadd.xlane.f32.xlu0 %v1099
    %v1101 = vpop.xlane.xlu0 %1100
    %v1102 = vsel %vm556, %v1072, 0.0
    %1103 = vadd.xlane.f32.xlu0 %v1102
    %v1104 = vpop.xlane.xlu0 %1103
    %v1105 = vsel %vm556, %v1073, 0.0
    %1106 = vadd.xlane.f32.xlu0 %v1105
    %v1107 = vpop.xlane.xlu0 %1106
    %v1108 = vsel %vm556, %v1074, 0.0
    %1109 = vadd.xlane.f32.xlu0 %v1108
    %v1110 = vpop.xlane.xlu0 %1109
    %v1111 = vsel %vm556, %v1075, 0.0
    %1112 = vadd.xlane.f32.xlu0 %v1111
    %v1113 = vpop.xlane.xlu0 %1112
    %v1114 = vsel %vm556, %v1076, 0.0
    %1115 = vadd.xlane.f32.xlu0 %v1114
    %v1116 = vpop.xlane.xlu0 %1115
    %v1117 = vsel %vm556, %v1077, 0.0
    %1118 = vadd.xlane.f32.xlu0 %v1117
    %v1119 = vpop.xlane.xlu0 %1118
    %v1120 = vsel %vm556, %v1078, 0.0
    %1121 = vadd.xlane.f32.xlu0 %v1120
    %v1122 = vpop.xlane.xlu0 %1121
    %v1123 = vsel %vm556, %v1079, 0.0
    %1124 = vadd.xlane.f32.xlu0 %v1123
    %v1125 = vpop.xlane.xlu0 %1124
    %v1126 = vsel %vm556, %v1080, 0.0
    %1127 = vadd.xlane.f32.xlu0 %v1126
    %v1128 = vpop.xlane.xlu0 %1127
    %v1129 = vld [vmem:[%s7] sm:$0x1]
    %v1131 = vlaneseq
    %v1132 = vshrl.u32 %v1131, 7
    %v1133 = vsub.s32 0, %v1132
    %v1134 = vrot.slane %v1129, %v1133
    %v1136 = vmul.f32 %v1026, %v1134
    %v1137 = vmul.f32 %v1027, %v1134
    %v1138 = vmul.f32 %v1028, %v1134
    %v1139 = vmul.f32 %v1029, %v1134
    %v1140 = vmul.f32 %v1030, %v1134
    %v1141 = vmul.f32 %v1031, %v1134
    %v1142 = vmul.f32 %v1032, %v1134
    %v1143 = vmul.f32 %v1033, %v1134
    %v1144 = vmul.f32 %v1034, %v1134
    %v1145 = vmul.f32 %v1035, %v1134
    %v1146 = vmul.f32 %v1036, %v1134
    %v1147 = vmul.f32 %v1037, %v1134
    %v1148 = vmul.f32 %v1038, %v1134
    %v1149 = vmul.f32 %v1039, %v1134
    %v1150 = vmul.f32 %v1040, %v1134
    %v1151 = vmul.f32 %v1041, %v1134
    %1152 = vadd.xlane.f32.xlu0 %v1136
    %v1153 = vpop.xlane.xlu0 %1152
    %1154 = vadd.xlane.f32.xlu0 %v1137
    %v1155 = vpop.xlane.xlu0 %1154
    %1156 = vadd.xlane.f32.xlu0 %v1138
    %v1157 = vpop.xlane.xlu0 %1156
    %1158 = vadd.xlane.f32.xlu0 %v1139
    %v1159 = vpop.xlane.xlu0 %1158
    %1160 = vadd.xlane.f32.xlu0 %v1140
    %v1161 = vpop.xlane.xlu0 %1160
    %1162 = vadd.xlane.f32.xlu0 %v1141
    %v1163 = vpop.xlane.xlu0 %1162
    %1164 = vadd.xlane.f32.xlu0 %v1142
    %v1165 = vpop.xlane.xlu0 %1164
    %1166 = vadd.xlane.f32.xlu0 %v1143
    %v1167 = vpop.xlane.xlu0 %1166
    %1168 = vadd.xlane.f32.xlu0 %v1144
    %v1169 = vpop.xlane.xlu0 %1168
    %1170 = vadd.xlane.f32.xlu0 %v1145
    %v1171 = vpop.xlane.xlu0 %1170
    %1172 = vadd.xlane.f32.xlu0 %v1146
    %v1173 = vpop.xlane.xlu0 %1172
    %1174 = vadd.xlane.f32.xlu0 %v1147
    %v1175 = vpop.xlane.xlu0 %1174
    %1176 = vadd.xlane.f32.xlu0 %v1148
    %v1177 = vpop.xlane.xlu0 %1176
    %1178 = vadd.xlane.f32.xlu0 %v1149
    %v1179 = vpop.xlane.xlu0 %1178
    %1180 = vadd.xlane.f32.xlu0 %v1150
    %v1181 = vpop.xlane.xlu0 %1180
    %1182 = vadd.xlane.f32.xlu0 %v1151
    %v1183 = vpop.xlane.xlu0 %1182
    %v1184 = vadd.f32 %v1083, %v1153
    %v1185 = vadd.f32 %v1086, %v1155
    %v1186 = vadd.f32 %v1089, %v1157
    %v1187 = vadd.f32 %v1092, %v1159
    %v1188 = vadd.f32 %v1095, %v1161
    %v1189 = vadd.f32 %v1098, %v1163
    %v1190 = vadd.f32 %v1101, %v1165
    %v1191 = vadd.f32 %v1104, %v1167
    %v1192 = vadd.f32 %v1107, %v1169
    %v1193 = vadd.f32 %v1110, %v1171
    %v1194 = vadd.f32 %v1113, %v1173
    %v1195 = vadd.f32 %v1116, %v1175
    %v1196 = vadd.f32 %v1119, %v1177
    %v1197 = vadd.f32 %v1122, %v1179
    %v1198 = vadd.f32 %v1125, %v1181
    %v1199 = vadd.f32 %v1128, %v1183
    %v1200 = vld [vmem:[#allocation2] sm:$0x1]
    %v1202 = vlaneseq
    %v1203 = vshrl.u32 %v1202, 7
    %v1204 = vsub.s32 0, %v1203
    %v1205 = vrot.slane %v1200, %v1204
    %v1207 = vadd.f32 %v1184, %v1205
    %v1208 = vadd.f32 %v1185, %v1205
    %v1209 = vadd.f32 %v1186, %v1205
    %v1210 = vadd.f32 %v1187, %v1205
    %v1211 = vadd.f32 %v1188, %v1205
    %v1212 = vadd.f32 %v1189, %v1205
    %v1213 = vadd.f32 %v1190, %v1205
    %v1214 = vadd.f32 %v1191, %v1205
    %v1215 = vadd.f32 %v1192, %v1205
    %v1216 = vadd.f32 %v1193, %v1205
    %v1217 = vadd.f32 %v1194, %v1205
    %v1218 = vadd.f32 %v1195, %v1205
    %v1219 = vadd.f32 %v1196, %v1205
    %v1220 = vadd.f32 %v1197, %v1205
    %v1221 = vadd.f32 %v1198, %v1205
    %v1222 = vadd.f32 %v1199, %v1205
    %v1223 = vxor.u32 %v1207, 2147483648
    %v1224 = vxor.u32 %v1208, 2147483648
    %v1225 = vxor.u32 %v1209, 2147483648
    %v1226 = vxor.u32 %v1210, 2147483648
    %v1227 = vxor.u32 %v1211, 2147483648
    %v1228 = vxor.u32 %v1212, 2147483648
    %v1229 = vxor.u32 %v1213, 2147483648
    %v1230 = vxor.u32 %v1214, 2147483648
    %v1231 = vxor.u32 %v1215, 2147483648
    %v1232 = vxor.u32 %v1216, 2147483648
    %v1233 = vxor.u32 %v1217, 2147483648
    %v1234 = vxor.u32 %v1218, 2147483648
    %v1235 = vxor.u32 %v1219, 2147483648
    %v1236 = vxor.u32 %v1220, 2147483648
    %v1237 = vxor.u32 %v1221, 2147483648
    %v1238 = vxor.u32 %v1222, 2147483648
    %v1239 = vmul.f32 %v1223, 1.442695
    %v1240 = vpow.pop %v1239
    %v1241 = vmul.f32 %v1224, 1.442695
    %v1242 = vpow.pop %v1241
    %v1243 = vmul.f32 %v1225, 1.442695
    %v1244 = vpow.pop %v1243
    %v1245 = vmul.f32 %v1226, 1.442695
    %v1246 = vpow.pop %v1245
    %v1247 = vmul.f32 %v1227, 1.442695
    %v1248 = vpow.pop %v1247
    %v1249 = vmul.f32 %v1228, 1.442695
    %v1250 = vpow.pop %v1249
    %v1251 = vmul.f32 %v1229, 1.442695
    %v1252 = vpow.pop %v1251
    %v1253 = vmul.f32 %v1230, 1.442695
    %v1254 = vpow.pop %v1253
    %v1255 = vmul.f32 %v1231, 1.442695
    %v1256 = vpow.pop %v1255
    %v1257 = vmul.f32 %v1232, 1.442695
    %v1258 = vpow.pop %v1257
    %v1259 = vmul.f32 %v1233, 1.442695
    %v1260 = vpow.pop %v1259
    %v1261 = vmul.f32 %v1234, 1.442695
    %v1262 = vpow.pop %v1261
    %v1263 = vmul.f32 %v1235, 1.442695
    %v1264 = vpow.pop %v1263
    %v1265 = vmul.f32 %v1236, 1.442695
    %v1266 = vpow.pop %v1265
    %v1267 = vmul.f32 %v1237, 1.442695
    %v1268 = vpow.pop %v1267
    %v1269 = vmul.f32 %v1238, 1.442695
    %v1270 = vpow.pop %v1269
    %v1271 = vadd.f32 %v1240, 1.0
    %v1272 = vadd.f32 %v1242, 1.0
    %v1273 = vadd.f32 %v1244, 1.0
    %v1274 = vadd.f32 %v1246, 1.0
    %v1275 = vadd.f32 %v1248, 1.0
    %v1276 = vadd.f32 %v1250, 1.0
    %v1277 = vadd.f32 %v1252, 1.0
    %v1278 = vadd.f32 %v1254, 1.0
    %v1279 = vadd.f32 %v1256, 1.0
    %v1280 = vadd.f32 %v1258, 1.0
    %v1281 = vadd.f32 %v1260, 1.0
    %v1282 = vadd.f32 %v1262, 1.0
    %v1283 = vadd.f32 %v1264, 1.0
    %v1284 = vadd.f32 %v1266, 1.0
    %v1285 = vadd.f32 %v1268, 1.0
    %v1286 = vadd.f32 %v1270, 1.0
    %v1287 = vrcp.pop %v1271
    %v1288 = vmul.f32 1.0, %v1287
    %v1289 = vrcp.pop %v1272
    %v1290 = vmul.f32 1.0, %v1289
    %v1291 = vrcp.pop %v1273
    %v1292 = vmul.f32 1.0, %v1291
    %v1293 = vrcp.pop %v1274
    %v1294 = vmul.f32 1.0, %v1293
    %v1295 = vrcp.pop %v1275
    %v1296 = vmul.f32 1.0, %v1295
    %v1297 = vrcp.pop %v1276
    %v1298 = vmul.f32 1.0, %v1297
    %v1299 = vrcp.pop %v1277
    %v1300 = vmul.f32 1.0, %v1299
    %v1301 = vrcp.pop %v1278
    %v1302 = vmul.f32 1.0, %v1301
    %v1303 = vrcp.pop %v1279
    %v1304 = vmul.f32 1.0, %v1303
    %v1305 = vrcp.pop %v1280
    %v1306 = vmul.f32 1.0, %v1305
    %v1307 = vrcp.pop %v1281
    %v1308 = vmul.f32 1.0, %v1307
    %v1309 = vrcp.pop %v1282
    %v1310 = vmul.f32 1.0, %v1309
    %v1311 = vrcp.pop %v1283
    %v1312 = vmul.f32 1.0, %v1311
    %v1313 = vrcp.pop %v1284
    %v1314 = vmul.f32 1.0, %v1313
    %v1315 = vrcp.pop %v1285
    %v1316 = vmul.f32 1.0, %v1315
    %v1317 = vrcp.pop %v1286
    %v1318 = vmul.f32 1.0, %v1317
    %1335 = vset.pattern.permute.xlu0 0
    %1336 = vperm.xlu0 %1335, %v1288
    %v1337 = vpop.permute.xlu0 %1336
    %1338 = vset.pattern.permute.xlu0 0
    %1339 = vperm.xlu0 %1338, %v1290
    %v1340 = vpop.permute.xlu0 %1339
    %1341 = vset.pattern.permute.xlu0 0
    %1342 = vperm.xlu0 %1341, %v1292
    %v1343 = vpop.permute.xlu0 %1342
    %1344 = vset.pattern.permute.xlu0 0
    %1345 = vperm.xlu0 %1344, %v1294
    %v1346 = vpop.permute.xlu0 %1345
    %1347 = vset.pattern.permute.xlu0 0
    %1348 = vperm.xlu0 %1347, %v1296
    %v1349 = vpop.permute.xlu0 %1348
    %1350 = vset.pattern.permute.xlu0 0
    %1351 = vperm.xlu0 %1350, %v1298
    %v1352 = vpop.permute.xlu0 %1351
    %1353 = vset.pattern.permute.xlu0 0
    %1354 = vperm.xlu0 %1353, %v1300
    %v1355 = vpop.permute.xlu0 %1354
    %1356 = vset.pattern.permute.xlu0 0
    %1357 = vperm.xlu0 %1356, %v1302
    %v1358 = vpop.permute.xlu0 %1357
    %1359 = vset.pattern.permute.xlu0 0
    %1360 = vperm.xlu0 %1359, %v1304
    %v1361 = vpop.permute.xlu0 %1360
    %1362 = vset.pattern.permute.xlu0 0
    %1363 = vperm.xlu0 %1362, %v1306
    %v1364 = vpop.permute.xlu0 %1363
    %1365 = vset.pattern.permute.xlu0 0
    %1366 = vperm.xlu0 %1365, %v1308
    %v1367 = vpop.permute.xlu0 %1366
    %1368 = vset.pattern.permute.xlu0 0
    %1369 = vperm.xlu0 %1368, %v1310
    %v1370 = vpop.permute.xlu0 %1369
    %1371 = vset.pattern.permute.xlu0 0
    %1372 = vperm.xlu0 %1371, %v1312
    %v1373 = vpop.permute.xlu0 %1372
    %1374 = vset.pattern.permute.xlu0 0
    %1375 = vperm.xlu0 %1374, %v1314
    %v1376 = vpop.permute.xlu0 %1375
    %1377 = vset.pattern.permute.xlu0 0
    %1378 = vperm.xlu0 %1377, %v1316
    %v1379 = vpop.permute.xlu0 %1378
    %1380 = vset.pattern.permute.xlu0 0
    %1381 = vperm.xlu0 %1380, %v1318
    %v1382 = vpop.permute.xlu0 %1381
    %v1383 = vlaneseq
    %v1384 = vshrl.u32 %v1383, 7
    %v1385 = vsub.s32 %v53, %v1384
    %v1386 = vrot.slane %v1337, %v1385
    %v1387 = vadd.s32 %v53, 4294967288
    %v1388 = vlaneseq
    %v1389 = vshrl.u32 %v1388, 7
    %v1390 = vsub.s32 %v1387, %v1389
    %v1391 = vrot.slane %v1340, %v1390
    %vm1392 = vcmask 130112
    %v1393 = vsel %vm1392, %v1391, %v1386
    %v1394 = vadd.s32 %v53, 4294967280
    %v1395 = vlaneseq
    %v1396 = vshrl.u32 %v1395, 7
    %v1397 = vsub.s32 %v1394, %v1396
    %v1398 = vrot.slane %v1343, %v1397
    %vm1399 = vcmask 195712
    %v1400 = vsel %vm1399, %v1398, %v1393
    %v1401 = vadd.s32 %v53, 4294967272
    %v1402 = vlaneseq
    %v1403 = vshrl.u32 %v1402, 7
    %v1404 = vsub.s32 %v1401, %v1403
    %v1405 = vrot.slane %v1346, %v1404
    %vm1406 = vcmask 261312
    %v1407 = vsel %vm1406, %v1405, %v1400
    %v1408 = vadd.s32 %v53, 4294967264
    %v1409 = vlaneseq
    %v1410 = vshrl.u32 %v1409, 7
    %v1411 = vsub.s32 %v1408, %v1410
    %v1412 = vrot.slane %v1349, %v1411
    %vm1413 = vcmask 326912
    %v1414 = vsel %vm1413, %v1412, %v1407
    %v1415 = vadd.s32 %v53, 4294967256
    %v1416 = vlaneseq
    %v1417 = vshrl.u32 %v1416, 7
    %v1418 = vsub.s32 %v1415, %v1417
    %v1419 = vrot.slane %v1352, %v1418
    %vm1420 = vcmask 392512
    %v1421 = vsel %vm1420, %v1419, %v1414
    %v1422 = vadd.s32 %v53, 4294967248
    %v1423 = vlaneseq
    %v1424 = vshrl.u32 %v1423, 7
    %v1425 = vsub.s32 %v1422, %v1424
    %v1426 = vrot.slane %v1355, %v1425
    %vm1427 = vcmask 458112
    %v1428 = vsel %vm1427, %v1426, %v1421
    %v1429 = vadd.s32 %v53, 4294967240
    %v1430 = vlaneseq
    %v1431 = vshrl.u32 %v1430, 7
    %v1432 = vsub.s32 %v1429, %v1431
    %v1433 = vrot.slane %v1358, %v1432
    %vm1434 = vcmask 523712
    %v1435 = vsel %vm1434, %v1433, %v1428
    %v1436 = vadd.s32 %v53, 4294967232
    %v1437 = vlaneseq
    %v1438 = vshrl.u32 %v1437, 7
    %v1439 = vsub.s32 %v1436, %v1438
    %v1440 = vrot.slane %v1361, %v1439
    %vm1441 = vcmask 589312
    %v1442 = vsel %vm1441, %v1440, %v1435
    %v1443 = vadd.s32 %v53, 4294967224
    %v1444 = vlaneseq
    %v1445 = vshrl.u32 %v1444, 7
    %v1446 = vsub.s32 %v1443, %v1445
    %v1447 = vrot.slane %v1364, %v1446
    %vm1448 = vcmask 654912
    %v1449 = vsel %vm1448, %v1447, %v1442
    %v1450 = vadd.s32 %v53, 4294967216
    %v1451 = vlaneseq
    %v1452 = vshrl.u32 %v1451, 7
    %v1453 = vsub.s32 %v1450, %v1452
    %v1454 = vrot.slane %v1367, %v1453
    %vm1455 = vcmask 720512
    %v1456 = vsel %vm1455, %v1454, %v1449
    %v1457 = vadd.s32 %v53, 4294967208
    %v1458 = vlaneseq
    %v1459 = vshrl.u32 %v1458, 7
    %v1460 = vsub.s32 %v1457, %v1459
    %v1461 = vrot.slane %v1370, %v1460
    %vm1462 = vcmask 786112
    %v1463 = vsel %vm1462, %v1461, %v1456
    %v1464 = vadd.s32 %v53, 4294967200
    %v1465 = vlaneseq
    %v1466 = vshrl.u32 %v1465, 7
    %v1467 = vsub.s32 %v1464, %v1466
    %v1468 = vrot.slane %v1373, %v1467
    %vm1469 = vcmask 851712
    %v1470 = vsel %vm1469, %v1468, %v1463
    %v1471 = vadd.s32 %v53, 4294967192
    %v1472 = vlaneseq
    %v1473 = vshrl.u32 %v1472, 7
    %v1474 = vsub.s32 %v1471, %v1473
    %v1475 = vrot.slane %v1376, %v1474
    %vm1476 = vcmask 917312
    %v1477 = vsel %vm1476, %v1475, %v1470
    %v1478 = vadd.s32 %v53, 4294967184
    %v1479 = vlaneseq
    %v1480 = vshrl.u32 %v1479, 7
    %v1481 = vsub.s32 %v1478, %v1480
    %v1482 = vrot.slane %v1379, %v1481
    %vm1483 = vcmask 982912
    %v1484 = vsel %vm1483, %v1482, %v1477
    %v1485 = vadd.s32 %v53, 4294967176
    %v1486 = vlaneseq
    %v1487 = vshrl.u32 %v1486, 7
    %v1488 = vsub.s32 %v1485, %v1487
    %v1489 = vrot.slane %v1382, %v1488
    %vm1490 = vcmask 1048512
    %v1491 = vsel %vm1490, %v1489, %v1484
    %1493 = vst [vmem:[#allocation3] sm:$0x1] %v1491
    // Predicated region
    $region38: #{tpu_custom_call.1} parent=1 // pred_check
      _
    $region39: #{tpu_custom_call.1} parent=1 // pred_check_branch
      %1495 = sbr.rel (0) target = $region41
    $region40: #{tpu_custom_call.1} parent=1 // pred_region
      %s1497 = ssub.s32 16, 16
      %1498 = vsyncadd [#allocation4], %s1497
      %s1500 = sshll.u32 [#allocation3], 4
      %s1501 = int_to_ptr.vmem [resolvable:$true] %s1500
      %1503 = dma.vmem_to_hbm [thread:$0]  %s1501, 16, %s9, [#allocation4]
    $region41: #{tpu_custom_call.1} parent=1 // pred_fallthru
      _
    // Predicated region
    $region42: #{tpu_custom_call.1} parent=1 // pred_check
      _
    $region43: #{tpu_custom_call.1} parent=1 // pred_check_branch
      %1505 = sbr.rel (0) target = $region45
    $region44: #{tpu_custom_call.1} parent=1 // pred_region
      %1506 = dma.done [#allocation4], 16
    $region45: #{tpu_custom_call.1} parent=1 // pred_fallthru
      _
    %1507 = vsyncpa [#allocation4], 1

</llo_original>
